<compile_context>
chip_gen: v5e
topology: v5e:2x2
jax: 0.10.0
libtpu: 0.0.40
codegen_flags: <defaults>
</compile_context>

<pallas_src>
import functools

import jax
import jax.numpy as jnp
from jax.experimental import pallas as pl
from jax.experimental.pallas import tpu as pltpu


LANE = 128    # TPU lane width
TILE = 512    # row / contraction tile for the large-graph (tiled) path


def _round_up(x, m):
    return (x + m - 1) // m * m


def _pad2(a, rows, cols):
    """Zero-pad a 2-D array up to (rows, cols)."""
    out = jnp.zeros((rows, cols), a.dtype)
    return out.at[: a.shape[0], : a.shape[1]].set(a)


def _vmem_policy():
    """Generation-aware fused-path budget + explicit scoped-VMEM limit."""
    cap = None
    try:
        cap = getattr(pltpu.get_tpu_info(), "vmem_capacity_bytes", None)
    except Exception:
        cap = None
    if not cap:
        cap = 64 * 1024 * 1024                   # conservative fallback (v7x per-TC)
    if cap >= 128 * 1024 * 1024:                 # v5e / v6e: 128 MiB physical VMEM
        budget = 80 * 1024 * 1024
    else:                                        # v7x: 64 MiB/TC; also the grid-less
        budget = 40 * 1024 * 1024                # fused call uses only one core ->
                                                 # prefer the row-parallel tiled path
    limit = int(cap * 0.9)
    return budget, limit


# ---------------------------------------------------------------------------
# Shared in-kernel helpers (operate on values, not refs)
# ---------------------------------------------------------------------------
def _masked_max_pool(h_bf16, mask_bf16, num_graphs_padded):
    """global_max_pool over node rows, in bf16.

    Valid ONLY because h is post-ReLU (>= 0): 0.0 is a correct max identity and
    multiply-by-{0,1}-mask (exact in bf16) zeroes padded nodes / other graphs.
    TODO(synk): for PyG-sorted batches, replace the Gp-pass mask-multiply with
                per-graph contiguous pl.ds row slices (offsets via scalar prefetch).
    """
    rows = []
    for g in range(num_graphs_padded):               # small static unroll
        masked = h_bf16 * mask_bf16[:, g:g + 1]      # VPU multiply, bf16
        rows.append(jnp.max(masked, axis=0, keepdims=True))   # sublane reduce (XLU)
    return jnp.concatenate(rows, axis=0)             # (Gp, Hp)


def _mlp_head(pooled, w1, b1, w2, b2, w3, b3):
    """lin1 -> lin2 -> out (no activations, matching the torch forward)."""
    z = jnp.dot(pooled.astype(jnp.bfloat16), w1,
                preferred_element_type=jnp.float32) + b1
    z = jnp.dot(z.astype(jnp.bfloat16), w2,
                preferred_element_type=jnp.float32) + b2
    z = jnp.dot(z.astype(jnp.bfloat16), w3,
                preferred_element_type=jnp.float32) + b3
    return z


# ---------------------------------------------------------------------------
# Pallas kernels
# ---------------------------------------------------------------------------
def fused_gcn_kernel(a_ref, x_ref, convw_ref, convb_ref, mask_ref,
                     w1_ref, b1_ref, w2_ref, b2_ref, w3_ref, b3_ref,
                     o_ref, *, num_layers, num_graphs_padded):
    """Whole forward in one launch: 4x (GCNConv+ReLU) -> max-pool -> 3 Linear.

    A_hat is loaded into VMEM once and reused by all layers; the pooled (G,H)
    block is consumed in-kernel (never written to HBM).
    """
    a = a_ref[...]                                   # (Np, Np) bf16, VMEM-resident
    h = x_ref[...]                                   # (Np, Fp) bf16
    for l in range(num_layers):                      # static unroll over 4 conv layers
        w = convw_ref[l]                             # (Fp, Fp) bf16
        b = convb_ref[l]                             # (1, Fp)  f32
        xw = jnp.dot(h, w, preferred_element_type=jnp.float32)          # X @ W
        z = jnp.dot(a, xw.astype(jnp.bfloat16),
                    preferred_element_type=jnp.float32) + b             # A_hat @ XW + b
        h = jnp.maximum(z, 0.0).astype(jnp.bfloat16)                    # ReLU
    pooled = _masked_max_pool(h, mask_ref[...], num_graphs_padded)      # bf16 pooling
    o_ref[...] = _mlp_head(pooled, w1_ref[...], b1_ref[...],
                           w2_ref[...], b2_ref[...], w3_ref[...], b3_ref[...])


def xw_kernel(x_ref, w_ref, o_ref):
    """Per-layer X @ W, row-tiled (computed once, reused by every A_hat tile)."""
    o_ref[...] = jnp.dot(x_ref[...], w_ref[...],
                         preferred_element_type=jnp.float32).astype(o_ref.dtype)


def agg_kernel(a_ref, xw_ref, b_ref, o_ref, acc_ref, *, tk):
    """relu(A_hat @ XW + b), contraction tiled over k.

    A_hat streamed in (tm, tk) tiles; XW is one whole-array block with a
    constant index_map -> DMA'd into VMEM once and kept resident, sliced with
    pl.ds per k-step (no per-(i,k) HBM re-streaming).
    """
    k = pl.program_id(1)

    @pl.when(k == 0)
    def _():
        acc_ref[...] = jnp.zeros_like(acc_ref)

    start = pl.multiple_of(k * tk, tk)
    acc_ref[...] += jnp.dot(a_ref[...], xw_ref[pl.ds(start, tk), :],
                            preferred_element_type=jnp.float32)

    @pl.when(k == pl.num_programs(1) - 1)
    def _():
        o_ref[...] = jnp.maximum(acc_ref[...] + b_ref[...], 0.0).astype(o_ref.dtype)


def pool_head_tiled_kernel(h_ref, mask_ref, w1_ref, b1_ref, w2_ref, b2_ref,
                           w3_ref, b3_ref, o_ref, pooled_ref, *, num_graphs_padded):
    """Tiled global_max_pool (running max over node-row tiles) + lin1/lin2/out."""
    i = pl.program_id(0)

    @pl.when(i == 0)
    def _():
        pooled_ref[...] = jnp.zeros_like(pooled_ref)     # 0 identity: h is post-ReLU

    tile_pool = _masked_max_pool(h_ref[...], mask_ref[...], num_graphs_padded)
    pooled_ref[...] = jnp.maximum(pooled_ref[...], tile_pool.astype(jnp.float32))

    @pl.when(i == pl.num_programs(0) - 1)
    def _():
        o_ref[...] = _mlp_head(pooled_ref[...], w1_ref[...], b1_ref[...],
                               w2_ref[...], b2_ref[...], w3_ref[...], b3_ref[...])


# ---------------------------------------------------------------------------
# pallas_call wrappers
# ---------------------------------------------------------------------------
def _fused_forward_padded(a_bf16, x_bf16, convw, convb, mask_bf16, head, gp,
                          *, vmem_limit):
    w1, b1, w2, b2, w3, b3 = head
    kern = functools.partial(fused_gcn_kernel, num_layers=convw.shape[0],
                             num_graphs_padded=gp)
    # No grid: every (padded, small) operand maps whole into VMEM, one launch.
    return pl.pallas_call(
        kern,
        out_shape=jax.ShapeDtypeStruct((gp, w3.shape[1]), jnp.float32),
        compiler_params=pltpu.CompilerParams(vmem_limit_bytes=vmem_limit),
    )(a_bf16, x_bf16, convw, convb, mask_bf16, w1, b1, w2, b2, w3, b3)


def _gcn_layer_tiled(a_bf16, h_bf16, w_bf16, b_f32, *, tm, tk, vmem_limit):
    """One GCNConv + ReLU with A_hat streamed through VMEM in (tm, tk) tiles."""
    np_, fp = h_bf16.shape
    # 1) XW once per layer (row-tiled), kept bf16 for the aggregation matmul.
    xw = pl.pallas_call(
        xw_kernel,
        out_shape=jax.ShapeDtypeStruct((np_, fp), jnp.bfloat16),
        grid=(np_ // tm,),
        in_specs=[pl.BlockSpec((tm, fp), lambda i: (i, 0)),
                  pl.BlockSpec((fp, fp), lambda i: (0, 0))],
        out_specs=pl.BlockSpec((tm, fp), lambda i: (i, 0)),
        compiler_params=pltpu.CompilerParams(
            dimension_semantics=("parallel",), vmem_limit_bytes=vmem_limit),
    )(h_bf16, w_bf16)
    # 2) relu(A_hat @ XW + b): rows "parallel" (megacore on v7x), contraction
    #    "arbitrary", f32 VMEM scratch accumulator; XW VMEM-resident (constant
    #    index_map -> single DMA).
    # TODO(synk): if xprof shows exposed DMA, sweep pipeline_mode=pl.Buffered(3)
    #             on the A_hat BlockSpec.
    return pl.pallas_call(
        functools.partial(agg_kernel, tk=tk),
        out_shape=jax.ShapeDtypeStruct((np_, fp), jnp.bfloat16),
        grid=(np_ // tm, np_ // tk),
        in_specs=[pl.BlockSpec((tm, tk), lambda i, k: (i, k)),
                  pl.BlockSpec((np_, fp), lambda i, k: (0, 0)),   # resident XW
                  pl.BlockSpec((1, fp), lambda i, k: (0, 0))],
        out_specs=pl.BlockSpec((tm, fp), lambda i, k: (i, 0)),
        scratch_shapes=[pltpu.VMEM((tm, fp), jnp.float32)],
        compiler_params=pltpu.CompilerParams(
            dimension_semantics=("parallel", "arbitrary"),
            vmem_limit_bytes=vmem_limit),
    )(a_bf16, xw, b_f32)


def _pool_head_tiled(h_bf16, mask_bf16, head, gp, *, tm, vmem_limit):
    """Fused global_max_pool + lin1/lin2/out, tiled over node-row blocks."""
    w1, b1, w2, b2, w3, b3 = head
    np_, fp = h_bf16.shape
    h2p, h4p, ncp = w1.shape[1], w2.shape[1], w3.shape[1]
    kern = functools.partial(pool_head_tiled_kernel, num_graphs_padded=gp)
    return pl.pallas_call(
        kern,
        out_shape=jax.ShapeDtypeStruct((gp, ncp), jnp.float32),
        grid=(np_ // tm,),
        in_specs=[pl.BlockSpec((tm, fp), lambda i: (i, 0)),
                  pl.BlockSpec((tm, gp), lambda i: (i, 0)),
                  pl.BlockSpec((fp, h2p), lambda i: (0, 0)),
                  pl.BlockSpec((1, h2p), lambda i: (0, 0)),
                  pl.BlockSpec((h2p, h4p), lambda i: (0, 0)),
                  pl.BlockSpec((1, h4p), lambda i: (0, 0)),
                  pl.BlockSpec((h4p, ncp), lambda i: (0, 0)),
                  pl.BlockSpec((1, ncp), lambda i: (0, 0))],
        out_specs=pl.BlockSpec((gp, ncp), lambda i: (0, 0)),
        scratch_shapes=[pltpu.VMEM((gp, fp), jnp.float32)],   # running max
        compiler_params=pltpu.CompilerParams(
            dimension_semantics=("arbitrary",), vmem_limit_bytes=vmem_limit),
    )(h_bf16, mask_bf16, w1, b1, w2, b2, w3, b3)


# ---------------------------------------------------------------------------
# Model: parameter init + one-time prepare + forward
# ---------------------------------------------------------------------------
def init_params(key, num_node_features, hidden_channels, num_classes):
    """Deterministic synthetic parameters (shapes follow GCNNet.__init__)."""
    h, h2, h4 = hidden_channels, hidden_channels // 2, hidden_channels // 4
    dims = [
        ("conv1", num_node_features, h),
        ("conv2", h, h),
        ("conv3", h, h),
        ("conv4", h, h),
        ("lin1", h, h2),
        ("lin2", h2, h4),
        ("out", h4, num_classes),
    ]
    params = {}
    for name, fin, fout in dims:
        key, kw, kb = jax.random.split(key, 3)
        scale = 1.0 / jnp.sqrt(jnp.float32(fin))
        params[f"{name}_w"] = jax.random.normal(kw, (fin, fout), jnp.float32) * scale
        params[f"{name}_b"] = jax.random.normal(kb, (fout,), jnp.float32) * 0.01
    return params


def prepare_params(params, num_node_features):
    """One-time padding / stacking / bf16 casting of parameters.

    Hoisted out of the per-batch forward (perf review): only A_hat / x / mask
    depend on the batch.
    """
    h_dim = params["conv1_w"].shape[1]
    h2 = params["lin1_w"].shape[1]
    h4 = params["lin2_w"].shape[1]
    ncls = params["out_w"].shape[1]

    fp = _round_up(max(num_node_features, h_dim), LANE)   # common padded feature width
    h2p = _round_up(h2, LANE)
    h4p = _round_up(h4, LANE)
    ncp = _round_up(ncls, LANE)

    convw = jnp.stack([_pad2(params[f"conv{i}_w"], fp, fp)
                       for i in range(1, 5)]).astype(jnp.bfloat16)      # (4, Fp, Fp)
    convb = jnp.stack([_pad2(params[f"conv{i}_b"].reshape(1, -1), 1, fp)
                       for i in range(1, 5)])                            # (4, 1, Fp) f32
    head = (
        _pad2(params["lin1_w"], fp, h2p).astype(jnp.bfloat16),
        _pad2(params["lin1_b"].reshape(1, -1), 1, h2p),
        _pad2(params["lin2_w"], h2p, h4p).astype(jnp.bfloat16),
        _pad2(params["lin2_b"].reshape(1, -1), 1, h4p),
        _pad2(params["out_w"], h4p, ncp).astype(jnp.bfloat16),
        _pad2(params["out_b"].reshape(1, -1), 1, ncp),
    )
    return {"convw": convw, "convb": convb, "head": head}


def gcnnet_forward(x, edge_index, batch, prep, *, num_graphs, num_classes,
                   force_tiled=False):
    """Mirrors GCNNet.forward: 4x (GCNConv + relu) -> global_max_pool -> 3 Linear."""
    n, _ = x.shape
    convw, convb, head = prep["convw"], prep["convb"], prep["head"]
    fp = convw.shape[-1]

    # --- glue (plain JAX): PyG gcn_norm  A_hat = D^-1/2 (A + I) D^-1/2 (dense)
    adj = jnp.zeros((n, n), jnp.float32).at[edge_index[0], edge_index[1]].set(1.0)
    adj = adj + jnp.eye(n, dtype=jnp.float32)
    dinv = jax.lax.rsqrt(adj.sum(axis=1))
    a_hat = dinv[:, None] * adj * dinv[None, :]

    # node -> graph one-hot membership ({0,1} exact in bf16); padded nodes/graphs
    # get all-zero entries.
    gp = _round_up(max(num_graphs, 8), 8)
    mask = (batch[:, None] == jnp.arange(num_graphs, dtype=batch.dtype)[None, :]
            ).astype(jnp.float32)

    budget, vmem_limit = _vmem_policy()

    # Fused-path footprint estimate (bf16 A_hat/x/mask + weights + in-kernel
    # temporaries), with a 1.3x safety margin.
    np128 = _round_up(n, LANE)
    fused_bytes = int(1.3 * (np128 * np128 * 2 + 2 * np128 * fp * 2
                             + np128 * gp * 2 + 7 * fp * fp * 2
                             + 3 * np128 * fp * 4))

    if (not force_tiled) and fused_bytes <= budget:
        np_ = np128
        a_bf16 = _pad2(a_hat, np_, np_).astype(jnp.bfloat16)
        x_bf16 = _pad2(x.astype(jnp.float32), np_, fp).astype(jnp.bfloat16)
        mask_p = _pad2(mask, np_, gp).astype(jnp.bfloat16)
        out = _fused_forward_padded(a_bf16, x_bf16, convw, convb, mask_p, head, gp,
                                    vmem_limit=vmem_limit)
    else:
        # Large-graph path: pad N up to the tile size so tm/tk never degrade to
        # 128; 512-wide tiles keep per-grid-step overhead / DMA inefficiency low
        # while staying small vs. VMEM.
        tm = tk = TILE
        np_ = _round_up(n, TILE)
        a_bf16 = _pad2(a_hat, np_, np_).astype(jnp.bfloat16)
        # TODO(synk): int8 (v5e/v6e) / fp8 (v7x) A_hat with a scale to halve the
        #             dominant HBM stream of this bandwidth-bound path.
        h_cur = _pad2(x.astype(jnp.float32), np_, fp).astype(jnp.bfloat16)
        mask_p = _pad2(mask, np_, gp).astype(jnp.bfloat16)
        for l in range(4):
            h_cur = _gcn_layer_tiled(a_bf16, h_cur, convw[l], convb[l],
                                     tm=tm, tk=tk, vmem_limit=vmem_limit)
        out = _pool_head_tiled(h_cur, mask_p, head, gp, tm=tm,
                               vmem_limit=vmem_limit)

    return out[:num_graphs, :num_classes]


def gcnnet_forward_ref(x, edge_index, batch, params, num_graphs):
    """Pure-JAX f32 reference for correctness checking."""
    n = x.shape[0]
    adj = jnp.zeros((n, n), jnp.float32).at[edge_index[0], edge_index[1]].set(1.0)
    adj = adj + jnp.eye(n, dtype=jnp.float32)
    dinv = jax.lax.rsqrt(adj.sum(axis=1))
    a_hat = dinv[:, None] * adj * dinv[None, :]
    h = x.astype(jnp.float32)
    for i in range(1, 5):
        h = jnp.maximum(a_hat @ (h @ params[f"conv{i}_w"]) + params[f"conv{i}_b"], 0.0)
    mask = batch[:, None] == jnp.arange(num_graphs, dtype=batch.dtype)[None, :]
    pooled = jnp.max(jnp.where(mask.T[:, :, None], h[None, :, :], -jnp.inf), axis=1)
    h = pooled @ params["lin1_w"] + params["lin1_b"]
    h = h @ params["lin2_w"] + params["lin2_b"]
    return h @ params["out_w"] + params["out_b"]


# ---------------------------------------------------------------------------
if __name__ == "__main__":
    key = jax.random.PRNGKey(0)

    num_nodes = 16
    num_node_features = 8
    hidden_channels = 32
    num_classes = 2
    num_graphs = 2
    nodes_per_graph = num_nodes // num_graphs

    kx, kp = jax.random.split(key)
    x = jax.random.normal(kx, (num_nodes, num_node_features), jnp.float32)

    # deterministic edges: a bidirectional ring inside each graph
    edges = []
    for g in range(num_graphs):
        base = g * nodes_per_graph
        for i in range(nodes_per_graph):
            a, b = base + i, base + (i + 1) % nodes_per_graph
            edges.append((a, b))
            edges.append((b, a))
    edge_index = jnp.asarray(edges, dtype=jnp.int32).T          # (2, E)
    batch = jnp.repeat(jnp.arange(num_graphs, dtype=jnp.int32), nodes_per_graph)

    params = init_params(kp, num_node_features, hidden_channels, num_classes)
    prep = prepare_params(params, num_node_features)   # one-time pad/stack/cast

    fused_fwd = jax.jit(functools.partial(
        gcnnet_forward, num_graphs=num_graphs, num_classes=num_classes))
    tiled_fwd = jax.jit(functools.partial(
        gcnnet_forward, num_graphs=num_graphs, num_classes=num_classes,
        force_tiled=True))

    out = jax.block_until_ready(fused_fwd(x, edge_index, batch, prep))
    out_tiled = jax.block_until_ready(tiled_fwd(x, edge_index, batch, prep))
    ref = gcnnet_forward_ref(x, edge_index, batch, params, num_graphs)

    assert out.shape == (num_graphs, num_classes)
    # bf16 MXU matmuls vs f32 reference -> relative/absolute tolerance check.
    assert jnp.allclose(out, ref, atol=5e-2, rtol=5e-2), (out, ref)
    assert jnp.allclose(out_tiled, ref, atol=5e-2, rtol=5e-2), (out_tiled, ref)
    assert jnp.allclose(out, out_tiled, atol=1e-2, rtol=1e-2), (out, out_tiled)

    print("KERNEL_OK")
</pallas_src>

<mosaic_0001>
module attributes {stable_mosaic.version = 11 : i64} {
  func.func @fused_gcn_kernel(%arg0: memref<128x128xbf16, #tpu.memory_space<vmem>>, %arg1: memref<128x128xbf16, #tpu.memory_space<vmem>>, %arg2: memref<4x128x128xbf16, #tpu.memory_space<vmem>>, %arg3: memref<4x1x128xf32, #tpu.memory_space<vmem>>, %arg4: memref<128x8xbf16, #tpu.memory_space<vmem>>, %arg5: memref<128x128xbf16, #tpu.memory_space<vmem>>, %arg6: memref<1x128xf32, #tpu.memory_space<vmem>>, %arg7: memref<128x128xbf16, #tpu.memory_space<vmem>>, %arg8: memref<1x128xf32, #tpu.memory_space<vmem>>, %arg9: memref<128x128xbf16, #tpu.memory_space<vmem>>, %arg10: memref<1x128xf32, #tpu.memory_space<vmem>>, %arg11: memref<8x128xf32, #tpu.memory_space<vmem>>) attributes {dimension_semantics = [], scalar_prefetch = 0 : i64, scratch_operands = 0 : i64, tpu.core_type = #tpu.core_type<tc>} {
    %c0 = arith.constant 0 : index
    %c0_0 = arith.constant 0 : index
    %0 = vector.load %arg0[%c0, %c0_0] : memref<128x128xbf16, #tpu.memory_space<vmem>>, vector<128x128xbf16>
    %c0_1 = arith.constant 0 : index
    %c0_2 = arith.constant 0 : index
    %1 = vector.load %arg1[%c0_1, %c0_2] : memref<128x128xbf16, #tpu.memory_space<vmem>>, vector<128x128xbf16>
    %c0_3 = arith.constant 0 : index
    %c0_4 = arith.constant 0 : index
    %c0_5 = arith.constant 0 : index
    %2 = vector.load %arg2[%c0_3, %c0_4, %c0_5] : memref<4x128x128xbf16, #tpu.memory_space<vmem>>, vector<1x128x128xbf16>
    %3 = vector.shape_cast %2 : vector<1x128x128xbf16> to vector<128x128xbf16>
    %c0_6 = arith.constant 0 : index
    %c0_7 = arith.constant 0 : index
    %c0_8 = arith.constant 0 : index
    %4 = vector.load %arg3[%c0_6, %c0_7, %c0_8] : memref<4x1x128xf32, #tpu.memory_space<vmem>>, vector<1x1x128xf32>
    %5 = vector.shape_cast %4 : vector<1x1x128xf32> to vector<1x128xf32>
    %cst = arith.constant dense<0.000000e+00> : vector<128x128xf32>
    %6 = tpu.matmul %1, %3, %cst {dimension_numbers = #tpu.dot_dimension_numbers<[1], [0], [0], [1], [0, 0, 1, 1], [], []>} : vector<128x128xbf16>, vector<128x128xbf16>, vector<128x128xf32> -> vector<128x128xf32>
    %7 = arith.truncf %6 : vector<128x128xf32> to vector<128x128xbf16>
    %cst_9 = arith.constant dense<0.000000e+00> : vector<128x128xf32>
    %8 = tpu.matmul %0, %7, %cst_9 {dimension_numbers = #tpu.dot_dimension_numbers<[1], [0], [0], [1], [0, 0, 1, 1], [], []>} : vector<128x128xbf16>, vector<128x128xbf16>, vector<128x128xf32> -> vector<128x128xf32>
    %9 = vector.broadcast %5 : vector<1x128xf32> to vector<128x128xf32>
    %10 = arith.addf %8, %9 : vector<128x128xf32>
    %cst_10 = arith.constant 0.000000e+00 : f32
    %11 = vector.broadcast %cst_10 : f32 to vector<128x128xf32>
    %12 = arith.maximumf %10, %11 : vector<128x128xf32>
    %13 = arith.truncf %12 : vector<128x128xf32> to vector<128x128xbf16>
    %c1 = arith.constant 1 : index
    %c0_11 = arith.constant 0 : index
    %c0_12 = arith.constant 0 : index
    %14 = vector.load %arg2[%c1, %c0_11, %c0_12] : memref<4x128x128xbf16, #tpu.memory_space<vmem>>, vector<1x128x128xbf16>
    %15 = vector.shape_cast %14 : vector<1x128x128xbf16> to vector<128x128xbf16>
    %c1_13 = arith.constant 1 : index
    %c0_14 = arith.constant 0 : index
    %c0_15 = arith.constant 0 : index
    %16 = vector.load %arg3[%c1_13, %c0_14, %c0_15] : memref<4x1x128xf32, #tpu.memory_space<vmem>>, vector<1x1x128xf32>
    %17 = vector.shape_cast %16 : vector<1x1x128xf32> to vector<1x128xf32>
    %cst_16 = arith.constant dense<0.000000e+00> : vector<128x128xf32>
    %18 = tpu.matmul %13, %15, %cst_16 {dimension_numbers = #tpu.dot_dimension_numbers<[1], [0], [0], [1], [0, 0, 1, 1], [], []>} : vector<128x128xbf16>, vector<128x128xbf16>, vector<128x128xf32> -> vector<128x128xf32>
    %19 = arith.truncf %18 : vector<128x128xf32> to vector<128x128xbf16>
    %cst_17 = arith.constant dense<0.000000e+00> : vector<128x128xf32>
    %20 = tpu.matmul %0, %19, %cst_17 {dimension_numbers = #tpu.dot_dimension_numbers<[1], [0], [0], [1], [0, 0, 1, 1], [], []>} : vector<128x128xbf16>, vector<128x128xbf16>, vector<128x128xf32> -> vector<128x128xf32>
    %21 = vector.broadcast %17 : vector<1x128xf32> to vector<128x128xf32>
    %22 = arith.addf %20, %21 : vector<128x128xf32>
    %cst_18 = arith.constant 0.000000e+00 : f32
    %23 = vector.broadcast %cst_18 : f32 to vector<128x128xf32>
    %24 = arith.maximumf %22, %23 : vector<128x128xf32>
    %25 = arith.truncf %24 : vector<128x128xf32> to vector<128x128xbf16>
    %c2 = arith.constant 2 : index
    %c0_19 = arith.constant 0 : index
    %c0_20 = arith.constant 0 : index
    %26 = vector.load %arg2[%c2, %c0_19, %c0_20] : memref<4x128x128xbf16, #tpu.memory_space<vmem>>, vector<1x128x128xbf16>
    %27 = vector.shape_cast %26 : vector<1x128x128xbf16> to vector<128x128xbf16>
    %c2_21 = arith.constant 2 : index
    %c0_22 = arith.constant 0 : index
    %c0_23 = arith.constant 0 : index
    %28 = vector.load %arg3[%c2_21, %c0_22, %c0_23] : memref<4x1x128xf32, #tpu.memory_space<vmem>>, vector<1x1x128xf32>
    %29 = vector.shape_cast %28 : vector<1x1x128xf32> to vector<1x128xf32>
    %cst_24 = arith.constant dense<0.000000e+00> : vector<128x128xf32>
    %30 = tpu.matmul %25, %27, %cst_24 {dimension_numbers = #tpu.dot_dimension_numbers<[1], [0], [0], [1], [0, 0, 1, 1], [], []>} : vector<128x128xbf16>, vector<128x128xbf16>, vector<128x128xf32> -> vector<128x128xf32>
    %31 = arith.truncf %30 : vector<128x128xf32> to vector<128x128xbf16>
    %cst_25 = arith.constant dense<0.000000e+00> : vector<128x128xf32>
    %32 = tpu.matmul %0, %31, %cst_25 {dimension_numbers = #tpu.dot_dimension_numbers<[1], [0], [0], [1], [0, 0, 1, 1], [], []>} : vector<128x128xbf16>, vector<128x128xbf16>, vector<128x128xf32> -> vector<128x128xf32>
    %33 = vector.broadcast %29 : vector<1x128xf32> to vector<128x128xf32>
    %34 = arith.addf %32, %33 : vector<128x128xf32>
    %cst_26 = arith.constant 0.000000e+00 : f32
    %35 = vector.broadcast %cst_26 : f32 to vector<128x128xf32>
    %36 = arith.maximumf %34, %35 : vector<128x128xf32>
    %37 = arith.truncf %36 : vector<128x128xf32> to vector<128x128xbf16>
    %c3 = arith.constant 3 : index
    %c0_27 = arith.constant 0 : index
    %c0_28 = arith.constant 0 : index
    %38 = vector.load %arg2[%c3, %c0_27, %c0_28] : memref<4x128x128xbf16, #tpu.memory_space<vmem>>, vector<1x128x128xbf16>
    %39 = vector.shape_cast %38 : vector<1x128x128xbf16> to vector<128x128xbf16>
    %c3_29 = arith.constant 3 : index
    %c0_30 = arith.constant 0 : index
    %c0_31 = arith.constant 0 : index
    %40 = vector.load %arg3[%c3_29, %c0_30, %c0_31] : memref<4x1x128xf32, #tpu.memory_space<vmem>>, vector<1x1x128xf32>
    %41 = vector.shape_cast %40 : vector<1x1x128xf32> to vector<1x128xf32>
    %cst_32 = arith.constant dense<0.000000e+00> : vector<128x128xf32>
    %42 = tpu.matmul %37, %39, %cst_32 {dimension_numbers = #tpu.dot_dimension_numbers<[1], [0], [0], [1], [0, 0, 1, 1], [], []>} : vector<128x128xbf16>, vector<128x128xbf16>, vector<128x128xf32> -> vector<128x128xf32>
    %43 = arith.truncf %42 : vector<128x128xf32> to vector<128x128xbf16>
    %cst_33 = arith.constant dense<0.000000e+00> : vector<128x128xf32>
    %44 = tpu.matmul %0, %43, %cst_33 {dimension_numbers = #tpu.dot_dimension_numbers<[1], [0], [0], [1], [0, 0, 1, 1], [], []>} : vector<128x128xbf16>, vector<128x128xbf16>, vector<128x128xf32> -> vector<128x128xf32>
    %45 = vector.broadcast %41 : vector<1x128xf32> to vector<128x128xf32>
    %46 = arith.addf %44, %45 : vector<128x128xf32>
    %cst_34 = arith.constant 0.000000e+00 : f32
    %47 = vector.broadcast %cst_34 : f32 to vector<128x128xf32>
    %48 = arith.maximumf %46, %47 : vector<128x128xf32>
    %49 = arith.truncf %48 : vector<128x128xf32> to vector<128x128xbf16>
    %c0_35 = arith.constant 0 : index
    %c0_36 = arith.constant 0 : index
    %50 = vector.load %arg4[%c0_35, %c0_36] : memref<128x8xbf16, #tpu.memory_space<vmem>>, vector<128x8xbf16>
    %51 = vector.extract_strided_slice %50 {offsets = [0, 0], sizes = [128, 1], strides = [1, 1]} : vector<128x8xbf16> to vector<128x1xbf16>
    %52 = vector.broadcast %51 : vector<128x1xbf16> to vector<128x128xbf16>
    %53 = arith.mulf %49, %52 : vector<128x128xbf16>
    %cst_37 = arith.constant dense<0xFF80> : vector<128xbf16>
    %54 = vector.multi_reduction <maximumf>, %53, %cst_37 [0] : vector<128x128xbf16> to vector<128xbf16>
    %55 = vector.shape_cast %54 : vector<128xbf16> to vector<1x128xbf16>
    %56 = vector.extract_strided_slice %50 {offsets = [0, 1], sizes = [128, 1], strides = [1, 1]} : vector<128x8xbf16> to vector<128x1xbf16>
    %57 = vector.broadcast %56 : vector<128x1xbf16> to vector<128x128xbf16>
    %58 = arith.mulf %49, %57 : vector<128x128xbf16>
    %cst_38 = arith.constant dense<0xFF80> : vector<128xbf16>
    %59 = vector.multi_reduction <maximumf>, %58, %cst_38 [0] : vector<128x128xbf16> to vector<128xbf16>
    %60 = vector.shape_cast %59 : vector<128xbf16> to vector<1x128xbf16>
    %61 = vector.extract_strided_slice %50 {offsets = [0, 2], sizes = [128, 1], strides = [1, 1]} : vector<128x8xbf16> to vector<128x1xbf16>
    %62 = vector.broadcast %61 : vector<128x1xbf16> to vector<128x128xbf16>
    %63 = arith.mulf %49, %62 : vector<128x128xbf16>
    %cst_39 = arith.constant dense<0xFF80> : vector<128xbf16>
    %64 = vector.multi_reduction <maximumf>, %63, %cst_39 [0] : vector<128x128xbf16> to vector<128xbf16>
    %65 = vector.shape_cast %64 : vector<128xbf16> to vector<1x128xbf16>
    %66 = vector.extract_strided_slice %50 {offsets = [0, 3], sizes = [128, 1], strides = [1, 1]} : vector<128x8xbf16> to vector<128x1xbf16>
    %67 = vector.broadcast %66 : vector<128x1xbf16> to vector<128x128xbf16>
    %68 = arith.mulf %49, %67 : vector<128x128xbf16>
    %cst_40 = arith.constant dense<0xFF80> : vector<128xbf16>
    %69 = vector.multi_reduction <maximumf>, %68, %cst_40 [0] : vector<128x128xbf16> to vector<128xbf16>
    %70 = vector.shape_cast %69 : vector<128xbf16> to vector<1x128xbf16>
    %71 = vector.extract_strided_slice %50 {offsets = [0, 4], sizes = [128, 1], strides = [1, 1]} : vector<128x8xbf16> to vector<128x1xbf16>
    %72 = vector.broadcast %71 : vector<128x1xbf16> to vector<128x128xbf16>
    %73 = arith.mulf %49, %72 : vector<128x128xbf16>
    %cst_41 = arith.constant dense<0xFF80> : vector<128xbf16>
    %74 = vector.multi_reduction <maximumf>, %73, %cst_41 [0] : vector<128x128xbf16> to vector<128xbf16>
    %75 = vector.shape_cast %74 : vector<128xbf16> to vector<1x128xbf16>
    %76 = vector.extract_strided_slice %50 {offsets = [0, 5], sizes = [128, 1], strides = [1, 1]} : vector<128x8xbf16> to vector<128x1xbf16>
    %77 = vector.broadcast %76 : vector<128x1xbf16> to vector<128x128xbf16>
    %78 = arith.mulf %49, %77 : vector<128x128xbf16>
    %cst_42 = arith.constant dense<0xFF80> : vector<128xbf16>
    %79 = vector.multi_reduction <maximumf>, %78, %cst_42 [0] : vector<128x128xbf16> to vector<128xbf16>
    %80 = vector.shape_cast %79 : vector<128xbf16> to vector<1x128xbf16>
    %81 = vector.extract_strided_slice %50 {offsets = [0, 6], sizes = [128, 1], strides = [1, 1]} : vector<128x8xbf16> to vector<128x1xbf16>
    %82 = vector.broadcast %81 : vector<128x1xbf16> to vector<128x128xbf16>
    %83 = arith.mulf %49, %82 : vector<128x128xbf16>
    %cst_43 = arith.constant dense<0xFF80> : vector<128xbf16>
    %84 = vector.multi_reduction <maximumf>, %83, %cst_43 [0] : vector<128x128xbf16> to vector<128xbf16>
    %85 = vector.shape_cast %84 : vector<128xbf16> to vector<1x128xbf16>
    %86 = vector.extract_strided_slice %50 {offsets = [0, 7], sizes = [128, 1], strides = [1, 1]} : vector<128x8xbf16> to vector<128x1xbf16>
    %87 = vector.broadcast %86 : vector<128x1xbf16> to vector<128x128xbf16>
    %88 = arith.mulf %49, %87 : vector<128x128xbf16>
    %cst_44 = arith.constant dense<0xFF80> : vector<128xbf16>
    %89 = vector.multi_reduction <maximumf>, %88, %cst_44 [0] : vector<128x128xbf16> to vector<128xbf16>
    %90 = vector.shape_cast %89 : vector<128xbf16> to vector<1x128xbf16>
    %91 = tpu.concatenate %55, %60, %65, %70, %75, %80, %85, %90 in 0 : vector<1x128xbf16>, vector<1x128xbf16>, vector<1x128xbf16>, vector<1x128xbf16>, vector<1x128xbf16>, vector<1x128xbf16>, vector<1x128xbf16>, vector<1x128xbf16> -> vector<8x128xbf16>
    %c0_45 = arith.constant 0 : index
    %c0_46 = arith.constant 0 : index
    %92 = vector.load %arg5[%c0_45, %c0_46] : memref<128x128xbf16, #tpu.memory_space<vmem>>, vector<128x128xbf16>
    %c0_47 = arith.constant 0 : index
    %c0_48 = arith.constant 0 : index
    %93 = vector.load %arg6[%c0_47, %c0_48] : memref<1x128xf32, #tpu.memory_space<vmem>>, vector<1x128xf32>
    %c0_49 = arith.constant 0 : index
    %c0_50 = arith.constant 0 : index
    %94 = vector.load %arg7[%c0_49, %c0_50] : memref<128x128xbf16, #tpu.memory_space<vmem>>, vector<128x128xbf16>
    %c0_51 = arith.constant 0 : index
    %c0_52 = arith.constant 0 : index
    %95 = vector.load %arg8[%c0_51, %c0_52] : memref<1x128xf32, #tpu.memory_space<vmem>>, vector<1x128xf32>
    %c0_53 = arith.constant 0 : index
    %c0_54 = arith.constant 0 : index
    %96 = vector.load %arg9[%c0_53, %c0_54] : memref<128x128xbf16, #tpu.memory_space<vmem>>, vector<128x128xbf16>
    %c0_55 = arith.constant 0 : index
    %c0_56 = arith.constant 0 : index
    %97 = vector.load %arg10[%c0_55, %c0_56] : memref<1x128xf32, #tpu.memory_space<vmem>>, vector<1x128xf32>
    %cst_57 = arith.constant dense<0.000000e+00> : vector<8x128xf32>
    %98 = tpu.matmul %91, %92, %cst_57 {dimension_numbers = #tpu.dot_dimension_numbers<[1], [0], [0], [1], [0, 0, 1, 1], [], []>} : vector<8x128xbf16>, vector<128x128xbf16>, vector<8x128xf32> -> vector<8x128xf32>
    %99 = vector.broadcast %93 : vector<1x128xf32> to vector<8x128xf32>
    %100 = arith.addf %98, %99 : vector<8x128xf32>
    %101 = arith.truncf %100 : vector<8x128xf32> to vector<8x128xbf16>
    %cst_58 = arith.constant dense<0.000000e+00> : vector<8x128xf32>
    %102 = tpu.matmul %101, %94, %cst_58 {dimension_numbers = #tpu.dot_dimension_numbers<[1], [0], [0], [1], [0, 0, 1, 1], [], []>} : vector<8x128xbf16>, vector<128x128xbf16>, vector<8x128xf32> -> vector<8x128xf32>
    %103 = vector.broadcast %95 : vector<1x128xf32> to vector<8x128xf32>
    %104 = arith.addf %102, %103 : vector<8x128xf32>
    %105 = arith.truncf %104 : vector<8x128xf32> to vector<8x128xbf16>
    %cst_59 = arith.constant dense<0.000000e+00> : vector<8x128xf32>
    %106 = tpu.matmul %105, %96, %cst_59 {dimension_numbers = #tpu.dot_dimension_numbers<[1], [0], [0], [1], [0, 0, 1, 1], [], []>} : vector<8x128xbf16>, vector<128x128xbf16>, vector<8x128xf32> -> vector<8x128xf32>
    %107 = vector.broadcast %97 : vector<1x128xf32> to vector<8x128xf32>
    %108 = arith.addf %106, %107 : vector<8x128xf32>
    %c0_60 = arith.constant 0 : index
    %c0_61 = arith.constant 0 : index
    %109 = vector.load %arg11[%c0_60, %c0_61] : memref<8x128xf32, #tpu.memory_space<vmem>>, vector<8x128xf32>
    tpu.vector_store %arg11[%c0_60, %c0_61], %108 {strides = array<i32>} : memref<8x128xf32, #tpu.memory_space<vmem>>, vector<8x128xf32>,
    return
  }
}

</mosaic_0001>

<llo_original>
// kernel: gcnnet_forward.1
$region0: #{gcnnet_forward.1}
  #allocation0 [shape = 'u32[]', space=smem, size = 0x4, offset = 0x4, fixed_abs, tag = 'smem constant byte address 0x4 - core index']
  #allocation1 [shape = 'u32[72,128]{1,0:T(1,128)}', space=vmem, size = 0x9000, scoped, tag = 'internal scratch']
  %s0 = inlined_call_operand.vmem [shape: bf16[128,128], index: 0, kind: input, shape index: {}]
  %s1 = inlined_call_operand.vmem [shape: bf16[128,128], index: 1, kind: input, shape index: {}]
  %s2 = inlined_call_operand.vmem [shape: bf16[4,128,128], index: 2, kind: input, shape index: {}]
  %s3 = inlined_call_operand.vmem [shape: f32[4,1,128], index: 3, kind: input, shape index: {}]
  %s4 = inlined_call_operand.vmem [shape: bf16[128,8], index: 4, kind: input, shape index: {}]
  %s5 = inlined_call_operand.vmem [shape: bf16[128,128], index: 5, kind: input, shape index: {}]
  %s6 = inlined_call_operand.vmem [shape: f32[1,128], index: 6, kind: input, shape index: {}]
  %s7 = inlined_call_operand.vmem [shape: bf16[128,128], index: 7, kind: input, shape index: {}]
  %s8 = inlined_call_operand.vmem [shape: f32[1,128], index: 8, kind: input, shape index: {}]
  %s9 = inlined_call_operand.vmem [shape: bf16[128,128], index: 9, kind: input, shape index: {}]
  %s10 = inlined_call_operand.vmem [shape: f32[1,128], index: 10, kind: input, shape index: {}]
  %s11 = inlined_call_operand.vmem [shape: f32[8,128], index: 11, kind: output, shape index: {}]
  %s12 = sld [smem:[#allocation0]]
  $region54: #{gcnnet_forward.1} parent=0
    _
  %s14 = ssub.s32 1, %s12
  %s15 = scalar_select 0, %s14, %s12
  // Predicated region
  $region2: #{gcnnet_forward.1} parent=0 // pred_check
    _
  $region3: #{gcnnet_forward.1} parent=0 // pred_check_branch
    %17 = sbr.rel (0) target = $region5
  $region4: #{gcnnet_forward.1} parent=0 // pred_region
    _
  $region5: #{gcnnet_forward.1} parent=0 // pred_fallthru
    _
  // Predicated region
  $region6: #{gcnnet_forward.1} parent=0 // pred_check
    _
  $region7: #{gcnnet_forward.1} parent=0 // pred_check_branch
    %19 = sbr.rel (0) target = $region9
  $region8: #{gcnnet_forward.1} parent=0 // pred_region
    _
  $region9: #{gcnnet_forward.1} parent=0 // pred_fallthru
    _
  // Predicated region
  $region10: #{gcnnet_forward.1} parent=0 // pred_check
    _
  $region11: #{gcnnet_forward.1} parent=0 // pred_check_branch
    %21 = sbr.rel (0) target = $region13
  $region12: #{gcnnet_forward.1} parent=0 // pred_region
    _
  $region13: #{gcnnet_forward.1} parent=0 // pred_fallthru
    _
  // Predicated region
  $region14: #{gcnnet_forward.1} parent=0 // pred_check
    _
  $region15: #{gcnnet_forward.1} parent=0 // pred_check_branch
    %23 = sbr.rel (0) target = $region17
  $region16: #{gcnnet_forward.1} parent=0 // pred_region
    _
  $region17: #{gcnnet_forward.1} parent=0 // pred_fallthru
    _
  // Predicated region
  $region18: #{gcnnet_forward.1} parent=0 // pred_check
    _
  $region19: #{gcnnet_forward.1} parent=0 // pred_check_branch
    %25 = sbr.rel (0) target = $region21
  $region20: #{gcnnet_forward.1} parent=0 // pred_region
    _
  $region21: #{gcnnet_forward.1} parent=0 // pred_fallthru
    _
  // Predicated region
  $region22: #{gcnnet_forward.1} parent=0 // pred_check
    _
  $region23: #{gcnnet_forward.1} parent=0 // pred_check_branch
    %27 = sbr.rel (0) target = $region25
  $region24: #{gcnnet_forward.1} parent=0 // pred_region
    _
  $region25: #{gcnnet_forward.1} parent=0 // pred_fallthru
    _
  // Predicated region
  $region26: #{gcnnet_forward.1} parent=0 // pred_check
    _
  $region27: #{gcnnet_forward.1} parent=0 // pred_check_branch
    %29 = sbr.rel (0) target = $region29
  $region28: #{gcnnet_forward.1} parent=0 // pred_region
    _
  $region29: #{gcnnet_forward.1} parent=0 // pred_fallthru
    _
  // Predicated region
  $region30: #{gcnnet_forward.1} parent=0 // pred_check
    _
  $region31: #{gcnnet_forward.1} parent=0 // pred_check_branch
    %31 = sbr.rel (0) target = $region33
  $region32: #{gcnnet_forward.1} parent=0 // pred_region
    _
  $region33: #{gcnnet_forward.1} parent=0 // pred_fallthru
    _
  // Predicated region
  $region34: #{gcnnet_forward.1} parent=0 // pred_check
    _
  $region35: #{gcnnet_forward.1} parent=0 // pred_check_branch
    %33 = sbr.rel (0) target = $region37
  $region36: #{gcnnet_forward.1} parent=0 // pred_region
    _
  $region37: #{gcnnet_forward.1} parent=0 // pred_fallthru
    _
  // Predicated region
  $region38: #{gcnnet_forward.1} parent=0 // pred_check
    _
  $region39: #{gcnnet_forward.1} parent=0 // pred_check_branch
    %35 = sbr.rel (0) target = $region41
  $region40: #{gcnnet_forward.1} parent=0 // pred_region
    _
  $region41: #{gcnnet_forward.1} parent=0 // pred_fallthru
    _
  // Predicated region
  $region42: #{gcnnet_forward.1} parent=0 // pred_check
    _
  $region43: #{gcnnet_forward.1} parent=0 // pred_check_branch
    %37 = sbr.rel (0) target = $region45
  $region44: #{gcnnet_forward.1} parent=0 // pred_region
    _
  $region45: #{gcnnet_forward.1} parent=0 // pred_fallthru
    _
  %v38 = vld [vmem:[%s0] sm:$0xf]
  %v39 = vld [vmem:[%s0 + $0x4] sm:$0xf]
  %v40 = vld [vmem:[%s0 + $0x8] sm:$0xf]
  %v41 = vld [vmem:[%s0 + $0xc] sm:$0xf]
  %v42 = vld [vmem:[%s0 + $0x10] sm:$0xf]
  %v43 = vld [vmem:[%s0 + $0x14] sm:$0xf]
  %v44 = vld [vmem:[%s0 + $0x18] sm:$0xf]
  %v45 = vld [vmem:[%s0 + $0x1c] sm:$0xf]
  %v46 = vld [vmem:[%s0 + $0x20] sm:$0xf]
  %v47 = vld [vmem:[%s0 + $0x24] sm:$0xf]
  %v48 = vld [vmem:[%s0 + $0x28] sm:$0xf]
  %v49 = vld [vmem:[%s0 + $0x2c] sm:$0xf]
  %v50 = vld [vmem:[%s0 + $0x30] sm:$0xf]
  %v51 = vld [vmem:[%s0 + $0x34] sm:$0xf]
  %v52 = vld [vmem:[%s0 + $0x38] sm:$0xf]
  %v53 = vld [vmem:[%s0 + $0x3c] sm:$0xf]
  %v54 = vld [vmem:[%s1] sm:$0xf]
  %v55 = vld [vmem:[%s1 + $0x4] sm:$0xf]
  %v56 = vld [vmem:[%s1 + $0x8] sm:$0xf]
  %v57 = vld [vmem:[%s1 + $0xc] sm:$0xf]
  %v58 = vld [vmem:[%s1 + $0x10] sm:$0xf]
  %v59 = vld [vmem:[%s1 + $0x14] sm:$0xf]
  %v60 = vld [vmem:[%s1 + $0x18] sm:$0xf]
  %v61 = vld [vmem:[%s1 + $0x1c] sm:$0xf]
  %v62 = vld [vmem:[%s1 + $0x20] sm:$0xf]
  %v63 = vld [vmem:[%s1 + $0x24] sm:$0xf]
  %v64 = vld [vmem:[%s1 + $0x28] sm:$0xf]
  %v65 = vld [vmem:[%s1 + $0x2c] sm:$0xf]
  %v66 = vld [vmem:[%s1 + $0x30] sm:$0xf]
  %v67 = vld [vmem:[%s1 + $0x34] sm:$0xf]
  %v68 = vld [vmem:[%s1 + $0x38] sm:$0xf]
  %v69 = vld [vmem:[%s1 + $0x3c] sm:$0xf]
  %v70 = vld [vmem:[%s2] sm:$0xf]
  %v71 = vld [vmem:[%s2 + $0x4] sm:$0xf]
  %v72 = vld [vmem:[%s2 + $0x8] sm:$0xf]
  %v73 = vld [vmem:[%s2 + $0xc] sm:$0xf]
  %v74 = vld [vmem:[%s2 + $0x10] sm:$0xf]
  %v75 = vld [vmem:[%s2 + $0x14] sm:$0xf]
  %v76 = vld [vmem:[%s2 + $0x18] sm:$0xf]
  %v77 = vld [vmem:[%s2 + $0x1c] sm:$0xf]
  %v78 = vld [vmem:[%s2 + $0x20] sm:$0xf]
  %v79 = vld [vmem:[%s2 + $0x24] sm:$0xf]
  %v80 = vld [vmem:[%s2 + $0x28] sm:$0xf]
  %v81 = vld [vmem:[%s2 + $0x2c] sm:$0xf]
  %v82 = vld [vmem:[%s2 + $0x30] sm:$0xf]
  %v83 = vld [vmem:[%s2 + $0x34] sm:$0xf]
  %v84 = vld [vmem:[%s2 + $0x38] sm:$0xf]
  %v85 = vld [vmem:[%s2 + $0x3c] sm:$0xf]
  %v86 = vld [vmem:[%s3] sm:$0x1]
  %v103 = vunpack.c.l.b16 %v54
  %v104 = vunpack.c.l.b16 %v55
  %v105 = vunpack.c.l.b16 %v56
  %v106 = vunpack.c.l.b16 %v57
  %v107 = vunpack.c.l.b16 %v58
  %v108 = vunpack.c.l.b16 %v59
  %v109 = vunpack.c.l.b16 %v60
  %v110 = vunpack.c.l.b16 %v61
  %v111 = vunpack.c.l.b16 %v62
  %v112 = vunpack.c.l.b16 %v63
  %v113 = vunpack.c.l.b16 %v64
  %v114 = vunpack.c.l.b16 %v65
  %v115 = vunpack.c.l.b16 %v66
  %v116 = vunpack.c.l.b16 %v67
  %v117 = vunpack.c.l.b16 %v68
  %v118 = vunpack.c.l.b16 %v69
  %v119 = vpack.c.b16 %v104, %v103
  %v120 = vpack.c.b16 %v106, %v105
  %v121 = vpack.c.b16 %v108, %v107
  %v122 = vpack.c.b16 %v110, %v109
  %v123 = vpack.c.b16 %v112, %v111
  %v124 = vpack.c.b16 %v114, %v113
  %v125 = vpack.c.b16 %v116, %v115
  %v126 = vpack.c.b16 %v118, %v117
  %v151 = vunpack.c.l.b16 %v70
  %v152 = vunpack.c.l.b16 %v71
  %v153 = vunpack.c.l.b16 %v72
  %v154 = vunpack.c.l.b16 %v73
  %v155 = vunpack.c.l.b16 %v74
  %v156 = vunpack.c.l.b16 %v75
  %v157 = vunpack.c.l.b16 %v76
  %v158 = vunpack.c.l.b16 %v77
  %v159 = vunpack.c.l.b16 %v78
  %v160 = vunpack.c.l.b16 %v79
  %v161 = vunpack.c.l.b16 %v80
  %v162 = vunpack.c.l.b16 %v81
  %v163 = vunpack.c.l.b16 %v82
  %v164 = vunpack.c.l.b16 %v83
  %v165 = vunpack.c.l.b16 %v84
  %v166 = vunpack.c.l.b16 %v85
  %v167 = vpack.c.b16 %v152, %v151
  %v168 = vpack.c.b16 %v154, %v153
  %v169 = vpack.c.b16 %v156, %v155
  %v170 = vpack.c.b16 %v158, %v157
  %v171 = vpack.c.b16 %v160, %v159
  %v172 = vpack.c.b16 %v162, %v161
  %v173 = vpack.c.b16 %v164, %v163
  %v174 = vpack.c.b16 %v166, %v165
  %183 = vmatpush.bf16.msra.mxu0 %v174
  %184 = vmatpush.bf16.msra.mxu0 %v173
  %185 = vmatpush.bf16.msra.mxu0 %v172
  %186 = vmatpush.bf16.msra.mxu0 %v171
  %187 = vmatpush.bf16.msra.mxu0 %v170
  %188 = vmatpush.bf16.msra.mxu0 %v169
  %189 = vmatpush.bf16.msra.mxu0 %v168
  %190 = vmatpush.bf16.msra.mxu0 %v167
  %191 = vmatmul.bf16.gmra.mxu0 %v119
  %v192 = vpop.f32.mrf.mxu0
  %v193 = vadd.f32 0.0, %v192
  %v194 = vpop.f32.mrf.mxu0
  %v195 = vadd.f32 0.0, %v194
  %196 = vmatmul.bf16.gmra.mxu0 %v120
  %v197 = vpop.f32.mrf.mxu0
  %v198 = vadd.f32 0.0, %v197
  %v199 = vpop.f32.mrf.mxu0
  %v200 = vadd.f32 0.0, %v199
  %201 = vmatmul.bf16.gmra.mxu0 %v121
  %v202 = vpop.f32.mrf.mxu0
  %v203 = vadd.f32 0.0, %v202
  %v204 = vpop.f32.mrf.mxu0
  %v205 = vadd.f32 0.0, %v204
  %206 = vmatmul.bf16.gmra.mxu0 %v122
  %v207 = vpop.f32.mrf.mxu0
  %v208 = vadd.f32 0.0, %v207
  %v209 = vpop.f32.mrf.mxu0
  %v210 = vadd.f32 0.0, %v209
  %211 = vmatmul.bf16.gmra.mxu0 %v123
  %v212 = vpop.f32.mrf.mxu0
  %v213 = vadd.f32 0.0, %v212
  %v214 = vpop.f32.mrf.mxu0
  %v215 = vadd.f32 0.0, %v214
  %216 = vmatmul.bf16.gmra.mxu0 %v124
  %v217 = vpop.f32.mrf.mxu0
  %v218 = vadd.f32 0.0, %v217
  %v219 = vpop.f32.mrf.mxu0
  %v220 = vadd.f32 0.0, %v219
  %221 = vmatmul.bf16.gmra.mxu0 %v125
  %v222 = vpop.f32.mrf.mxu0
  %v223 = vadd.f32 0.0, %v222
  %v224 = vpop.f32.mrf.mxu0
  %v225 = vadd.f32 0.0, %v224
  %226 = vmatmul.bf16.gmra.mxu0 %v126
  %v227 = vpop.f32.mrf.mxu0
  %v228 = vadd.f32 0.0, %v227
  %v229 = vpop.f32.mrf.mxu0
  %v230 = vadd.f32 0.0, %v229
  %231 = vdwg.mxu0
  %v232 = vpack.c.bf16 %v195, %v193
  %v233 = vpack.c.bf16 %v200, %v198
  %v234 = vpack.c.bf16 %v205, %v203
  %v235 = vpack.c.bf16 %v210, %v208
  %v236 = vpack.c.bf16 %v215, %v213
  %v237 = vpack.c.bf16 %v220, %v218
  %v238 = vpack.c.bf16 %v225, %v223
  %v239 = vpack.c.bf16 %v230, %v228
  %v241 = vperm.slane %v86, 0
  %v259 = vunpack.c.l.b16 %v38
  %v260 = vunpack.c.l.b16 %v39
  %v261 = vunpack.c.l.b16 %v40
  %v262 = vunpack.c.l.b16 %v41
  %v263 = vunpack.c.l.b16 %v42
  %v264 = vunpack.c.l.b16 %v43
  %v265 = vunpack.c.l.b16 %v44
  %v266 = vunpack.c.l.b16 %v45
  %v267 = vunpack.c.l.b16 %v46
  %v268 = vunpack.c.l.b16 %v47
  %v269 = vunpack.c.l.b16 %v48
  %v270 = vunpack.c.l.b16 %v49
  %v271 = vunpack.c.l.b16 %v50
  %v272 = vunpack.c.l.b16 %v51
  %v273 = vunpack.c.l.b16 %v52
  %v274 = vunpack.c.l.b16 %v53
  %v275 = vpack.c.b16 %v260, %v259
  %v276 = vpack.c.b16 %v262, %v261
  %v277 = vpack.c.b16 %v264, %v263
  %v278 = vpack.c.b16 %v266, %v265
  %v279 = vpack.c.b16 %v268, %v267
  %v280 = vpack.c.b16 %v270, %v269
  %v281 = vpack.c.b16 %v272, %v271
  %v282 = vpack.c.b16 %v274, %v273
  %291 = vmatpush.bf16.msra.mxu0 %v239
  %292 = vmatpush.bf16.msra.mxu0 %v238
  %293 = vmatpush.bf16.msra.mxu0 %v237
  %294 = vmatpush.bf16.msra.mxu0 %v236
  %295 = vmatpush.bf16.msra.mxu0 %v235
  %296 = vmatpush.bf16.msra.mxu0 %v234
  %297 = vmatpush.bf16.msra.mxu0 %v233
  %298 = vmatpush.bf16.msra.mxu0 %v232
  %299 = vmatmul.bf16.gmra.mxu0 %v275
  %v300 = vpop.f32.mrf.mxu0
  %v301 = vadd.f32 %v241, %v300
  %v302 = vpop.f32.mrf.mxu0
  %v303 = vadd.f32 %v241, %v302
  %304 = vmatmul.bf16.gmra.mxu0 %v276
  %v305 = vpop.f32.mrf.mxu0
  %v306 = vadd.f32 %v241, %v305
  %v307 = vpop.f32.mrf.mxu0
  %v308 = vadd.f32 %v241, %v307
  %309 = vmatmul.bf16.gmra.mxu0 %v277
  %v310 = vpop.f32.mrf.mxu0
  %v311 = vadd.f32 %v241, %v310
  %v312 = vpop.f32.mrf.mxu0
  %v313 = vadd.f32 %v241, %v312
  %314 = vmatmul.bf16.gmra.mxu0 %v278
  %v315 = vpop.f32.mrf.mxu0
  %v316 = vadd.f32 %v241, %v315
  %v317 = vpop.f32.mrf.mxu0
  %v318 = vadd.f32 %v241, %v317
  %319 = vmatmul.bf16.gmra.mxu0 %v279
  %v320 = vpop.f32.mrf.mxu0
  %v321 = vadd.f32 %v241, %v320
  %v322 = vpop.f32.mrf.mxu0
  %v323 = vadd.f32 %v241, %v322
  %324 = vmatmul.bf16.gmra.mxu0 %v280
  %v325 = vpop.f32.mrf.mxu0
  %v326 = vadd.f32 %v241, %v325
  %v327 = vpop.f32.mrf.mxu0
  %v328 = vadd.f32 %v241, %v327
  %329 = vmatmul.bf16.gmra.mxu0 %v281
  %v330 = vpop.f32.mrf.mxu0
  %v331 = vadd.f32 %v241, %v330
  %v332 = vpop.f32.mrf.mxu0
  %v333 = vadd.f32 %v241, %v332
  %334 = vmatmul.bf16.gmra.mxu0 %v282
  %v335 = vpop.f32.mrf.mxu0
  %v336 = vadd.f32 %v241, %v335
  %v337 = vpop.f32.mrf.mxu0
  %v338 = vadd.f32 %v241, %v337
  %339 = vdwg.mxu0
  %v340 = vmax.f32 %v301, 0.0
  %v341 = vmax.f32 %v303, 0.0
  %v342 = vmax.f32 %v306, 0.0
  %v343 = vmax.f32 %v308, 0.0
  %v344 = vmax.f32 %v311, 0.0
  %v345 = vmax.f32 %v313, 0.0
  %v346 = vmax.f32 %v316, 0.0
  %v347 = vmax.f32 %v318, 0.0
  %v348 = vmax.f32 %v321, 0.0
  %v349 = vmax.f32 %v323, 0.0
  %v350 = vmax.f32 %v326, 0.0
  %v351 = vmax.f32 %v328, 0.0
  %v352 = vmax.f32 %v331, 0.0
  %v353 = vmax.f32 %v333, 0.0
  %v354 = vmax.f32 %v336, 0.0
  %v355 = vmax.f32 %v338, 0.0
  %v356 = vpack.c.bf16 %v341, %v340
  %v357 = vpack.c.bf16 %v343, %v342
  %v358 = vpack.c.bf16 %v345, %v344
  %v359 = vpack.c.bf16 %v347, %v346
  %v360 = vpack.c.bf16 %v349, %v348
  %v361 = vpack.c.bf16 %v351, %v350
  %v362 = vpack.c.bf16 %v353, %v352
  %v363 = vpack.c.bf16 %v355, %v354
  %s364 = scalar_lea.vmem %s2, 64
  %v365 = vld [vmem:[%s364] sm:$0xf]
  %v366 = vld [vmem:[%s364 + $0x4] sm:$0xf]
  %v367 = vld [vmem:[%s364 + $0x8] sm:$0xf]
  %v368 = vld [vmem:[%s364 + $0xc] sm:$0xf]
  %v369 = vld [vmem:[%s364 + $0x10] sm:$0xf]
  %v370 = vld [vmem:[%s364 + $0x14] sm:$0xf]
  %v371 = vld [vmem:[%s364 + $0x18] sm:$0xf]
  %v372 = vld [vmem:[%s364 + $0x1c] sm:$0xf]
  %v373 = vld [vmem:[%s364 + $0x20] sm:$0xf]
  %v374 = vld [vmem:[%s364 + $0x24] sm:$0xf]
  %v375 = vld [vmem:[%s364 + $0x28] sm:$0xf]
  %v376 = vld [vmem:[%s364 + $0x2c] sm:$0xf]
  %v377 = vld [vmem:[%s364 + $0x30] sm:$0xf]
  %v378 = vld [vmem:[%s364 + $0x34] sm:$0xf]
  %v379 = vld [vmem:[%s364 + $0x38] sm:$0xf]
  %v380 = vld [vmem:[%s364 + $0x3c] sm:$0xf]
  %s381 = scalar_lea.vmem %s3, 1
  %v382 = vld [vmem:[%s381] sm:$0x1]
  %v399 = vunpack.c.l.b16 %v365
  %v400 = vunpack.c.l.b16 %v366
  %v401 = vunpack.c.l.b16 %v367
  %v402 = vunpack.c.l.b16 %v368
  %v403 = vunpack.c.l.b16 %v369
  %v404 = vunpack.c.l.b16 %v370
  %v405 = vunpack.c.l.b16 %v371
  %v406 = vunpack.c.l.b16 %v372
  %v407 = vunpack.c.l.b16 %v373
  %v408 = vunpack.c.l.b16 %v374
  %v409 = vunpack.c.l.b16 %v375
  %v410 = vunpack.c.l.b16 %v376
  %v411 = vunpack.c.l.b16 %v377
  %v412 = vunpack.c.l.b16 %v378
  %v413 = vunpack.c.l.b16 %v379
  %v414 = vunpack.c.l.b16 %v380
  %v415 = vpack.c.b16 %v400, %v399
  %v416 = vpack.c.b16 %v402, %v401
  %v417 = vpack.c.b16 %v404, %v403
  %v418 = vpack.c.b16 %v406, %v405
  %v419 = vpack.c.b16 %v408, %v407
  %v420 = vpack.c.b16 %v410, %v409
  %v421 = vpack.c.b16 %v412, %v411
  %v422 = vpack.c.b16 %v414, %v413
  %431 = vmatpush.bf16.msra.mxu0 %v422
  %432 = vmatpush.bf16.msra.mxu0 %v421
  %433 = vmatpush.bf16.msra.mxu0 %v420
  %434 = vmatpush.bf16.msra.mxu0 %v419
  %435 = vmatpush.bf16.msra.mxu0 %v418
  %436 = vmatpush.bf16.msra.mxu0 %v417
  %437 = vmatpush.bf16.msra.mxu0 %v416
  %438 = vmatpush.bf16.msra.mxu0 %v415
  %439 = vmatmul.bf16.gmra.mxu0 %v356
  %v440 = vpop.f32.mrf.mxu0
  %v441 = vadd.f32 0.0, %v440
  %v442 = vpop.f32.mrf.mxu0
  %v443 = vadd.f32 0.0, %v442
  %444 = vmatmul.bf16.gmra.mxu0 %v357
  %v445 = vpop.f32.mrf.mxu0
  %v446 = vadd.f32 0.0, %v445
  %v447 = vpop.f32.mrf.mxu0
  %v448 = vadd.f32 0.0, %v447
  %449 = vmatmul.bf16.gmra.mxu0 %v358
  %v450 = vpop.f32.mrf.mxu0
  %v451 = vadd.f32 0.0, %v450
  %v452 = vpop.f32.mrf.mxu0
  %v453 = vadd.f32 0.0, %v452
  %454 = vmatmul.bf16.gmra.mxu0 %v359
  %v455 = vpop.f32.mrf.mxu0
  %v456 = vadd.f32 0.0, %v455
  %v457 = vpop.f32.mrf.mxu0
  %v458 = vadd.f32 0.0, %v457
  %459 = vmatmul.bf16.gmra.mxu0 %v360
  %v460 = vpop.f32.mrf.mxu0
  %v461 = vadd.f32 0.0, %v460
  %v462 = vpop.f32.mrf.mxu0
  %v463 = vadd.f32 0.0, %v462
  %464 = vmatmul.bf16.gmra.mxu0 %v361
  %v465 = vpop.f32.mrf.mxu0
  %v466 = vadd.f32 0.0, %v465
  %v467 = vpop.f32.mrf.mxu0
  %v468 = vadd.f32 0.0, %v467
  %469 = vmatmul.bf16.gmra.mxu0 %v362
  %v470 = vpop.f32.mrf.mxu0
  %v471 = vadd.f32 0.0, %v470
  %v472 = vpop.f32.mrf.mxu0
  %v473 = vadd.f32 0.0, %v472
  %474 = vmatmul.bf16.gmra.mxu0 %v363
  %v475 = vpop.f32.mrf.mxu0
  %v476 = vadd.f32 0.0, %v475
  %v477 = vpop.f32.mrf.mxu0
  %v478 = vadd.f32 0.0, %v477
  %479 = vdwg.mxu0
  %v480 = vpack.c.bf16 %v443, %v441
  %v481 = vpack.c.bf16 %v448, %v446
  %v482 = vpack.c.bf16 %v453, %v451
  %v483 = vpack.c.bf16 %v458, %v456
  %v484 = vpack.c.bf16 %v463, %v461
  %v485 = vpack.c.bf16 %v468, %v466
  %v486 = vpack.c.bf16 %v473, %v471
  %v487 = vpack.c.bf16 %v478, %v476
  %v489 = vperm.slane %v382, 0
  %491 = vmatpush.bf16.msra.mxu0 %v487
  %492 = vmatpush.bf16.msra.mxu0 %v486
  %493 = vmatpush.bf16.msra.mxu0 %v485
  %494 = vmatpush.bf16.msra.mxu0 %v484
  %495 = vmatpush.bf16.msra.mxu0 %v483
  %496 = vmatpush.bf16.msra.mxu0 %v482
  %497 = vmatpush.bf16.msra.mxu0 %v481
  %498 = vmatpush.bf16.msra.mxu0 %v480
  %499 = vmatmul.bf16.gmra.mxu0 %v275
  %v500 = vpop.f32.mrf.mxu0
  %v501 = vadd.f32 %v489, %v500
  %v502 = vpop.f32.mrf.mxu0
  %v503 = vadd.f32 %v489, %v502
  %504 = vmatmul.bf16.gmra.mxu0 %v276
  %v505 = vpop.f32.mrf.mxu0
  %v506 = vadd.f32 %v489, %v505
  %v507 = vpop.f32.mrf.mxu0
  %v508 = vadd.f32 %v489, %v507
  %509 = vmatmul.bf16.gmra.mxu0 %v277
  %v510 = vpop.f32.mrf.mxu0
  %v511 = vadd.f32 %v489, %v510
  %v512 = vpop.f32.mrf.mxu0
  %v513 = vadd.f32 %v489, %v512
  %514 = vmatmul.bf16.gmra.mxu0 %v278
  %v515 = vpop.f32.mrf.mxu0
  %v516 = vadd.f32 %v489, %v515
  %v517 = vpop.f32.mrf.mxu0
  %v518 = vadd.f32 %v489, %v517
  %519 = vmatmul.bf16.gmra.mxu0 %v279
  %v520 = vpop.f32.mrf.mxu0
  %v521 = vadd.f32 %v489, %v520
  %v522 = vpop.f32.mrf.mxu0
  %v523 = vadd.f32 %v489, %v522
  %524 = vmatmul.bf16.gmra.mxu0 %v280
  %v525 = vpop.f32.mrf.mxu0
  %v526 = vadd.f32 %v489, %v525
  %v527 = vpop.f32.mrf.mxu0
  %v528 = vadd.f32 %v489, %v527
  %529 = vmatmul.bf16.gmra.mxu0 %v281
  %v530 = vpop.f32.mrf.mxu0
  %v531 = vadd.f32 %v489, %v530
  %v532 = vpop.f32.mrf.mxu0
  %v533 = vadd.f32 %v489, %v532
  %534 = vmatmul.bf16.gmra.mxu0 %v282
  %v535 = vpop.f32.mrf.mxu0
  %v536 = vadd.f32 %v489, %v535
  %v537 = vpop.f32.mrf.mxu0
  %v538 = vadd.f32 %v489, %v537
  %539 = vdwg.mxu0
  %v540 = vmax.f32 %v501, 0.0
  %v541 = vmax.f32 %v503, 0.0
  %v542 = vmax.f32 %v506, 0.0
  %v543 = vmax.f32 %v508, 0.0
  %v544 = vmax.f32 %v511, 0.0
  %v545 = vmax.f32 %v513, 0.0
  %v546 = vmax.f32 %v516, 0.0
  %v547 = vmax.f32 %v518, 0.0
  %v548 = vmax.f32 %v521, 0.0
  %v549 = vmax.f32 %v523, 0.0
  %v550 = vmax.f32 %v526, 0.0
  %v551 = vmax.f32 %v528, 0.0
  %v552 = vmax.f32 %v531, 0.0
  %v553 = vmax.f32 %v533, 0.0
  %v554 = vmax.f32 %v536, 0.0
  %v555 = vmax.f32 %v538, 0.0
  %v556 = vpack.c.bf16 %v541, %v540
  %v557 = vpack.c.bf16 %v543, %v542
  %v558 = vpack.c.bf16 %v545, %v544
  %v559 = vpack.c.bf16 %v547, %v546
  %v560 = vpack.c.bf16 %v549, %v548
  %v561 = vpack.c.bf16 %v551, %v550
  %v562 = vpack.c.bf16 %v553, %v552
  %v563 = vpack.c.bf16 %v555, %v554
  %s564 = scalar_lea.vmem %s2, 128
  %v565 = vld [vmem:[%s564] sm:$0xf]
  %v566 = vld [vmem:[%s564 + $0x4] sm:$0xf]
  %v567 = vld [vmem:[%s564 + $0x8] sm:$0xf]
  %v568 = vld [vmem:[%s564 + $0xc] sm:$0xf]
  %v569 = vld [vmem:[%s564 + $0x10] sm:$0xf]
  %v570 = vld [vmem:[%s564 + $0x14] sm:$0xf]
  %v571 = vld [vmem:[%s564 + $0x18] sm:$0xf]
  %v572 = vld [vmem:[%s564 + $0x1c] sm:$0xf]
  %v573 = vld [vmem:[%s564 + $0x20] sm:$0xf]
  %v574 = vld [vmem:[%s564 + $0x24] sm:$0xf]
  %v575 = vld [vmem:[%s564 + $0x28] sm:$0xf]
  %v576 = vld [vmem:[%s564 + $0x2c] sm:$0xf]
  %v577 = vld [vmem:[%s564 + $0x30] sm:$0xf]
  %v578 = vld [vmem:[%s564 + $0x34] sm:$0xf]
  %v579 = vld [vmem:[%s564 + $0x38] sm:$0xf]
  %v580 = vld [vmem:[%s564 + $0x3c] sm:$0xf]
  %s581 = scalar_lea.vmem %s3, 2
  %v582 = vld [vmem:[%s581] sm:$0x1]
  %v599 = vunpack.c.l.b16 %v565
  %v600 = vunpack.c.l.b16 %v566
  %v601 = vunpack.c.l.b16 %v567
  %v602 = vunpack.c.l.b16 %v568
  %v603 = vunpack.c.l.b16 %v569
  %v604 = vunpack.c.l.b16 %v570
  %v605 = vunpack.c.l.b16 %v571
  %v606 = vunpack.c.l.b16 %v572
  %v607 = vunpack.c.l.b16 %v573
  %v608 = vunpack.c.l.b16 %v574
  %v609 = vunpack.c.l.b16 %v575
  %v610 = vunpack.c.l.b16 %v576
  %v611 = vunpack.c.l.b16 %v577
  %v612 = vunpack.c.l.b16 %v578
  %v613 = vunpack.c.l.b16 %v579
  %v614 = vunpack.c.l.b16 %v580
  %v615 = vpack.c.b16 %v600, %v599
  %v616 = vpack.c.b16 %v602, %v601
  %v617 = vpack.c.b16 %v604, %v603
  %v618 = vpack.c.b16 %v606, %v605
  %v619 = vpack.c.b16 %v608, %v607
  %v620 = vpack.c.b16 %v610, %v609
  %v621 = vpack.c.b16 %v612, %v611
  %v622 = vpack.c.b16 %v614, %v613
  %631 = vmatpush.bf16.msra.mxu0 %v622
  %632 = vmatpush.bf16.msra.mxu0 %v621
  %633 = vmatpush.bf16.msra.mxu0 %v620
  %634 = vmatpush.bf16.msra.mxu0 %v619
  %635 = vmatpush.bf16.msra.mxu0 %v618
  %636 = vmatpush.bf16.msra.mxu0 %v617
  %637 = vmatpush.bf16.msra.mxu0 %v616
  %638 = vmatpush.bf16.msra.mxu0 %v615
  %639 = vmatmul.bf16.gmra.mxu0 %v556
  %v640 = vpop.f32.mrf.mxu0
  %v641 = vadd.f32 0.0, %v640
  %v642 = vpop.f32.mrf.mxu0
  %v643 = vadd.f32 0.0, %v642
  %644 = vmatmul.bf16.gmra.mxu0 %v557
  %v645 = vpop.f32.mrf.mxu0
  %v646 = vadd.f32 0.0, %v645
  %v647 = vpop.f32.mrf.mxu0
  %v648 = vadd.f32 0.0, %v647
  %649 = vmatmul.bf16.gmra.mxu0 %v558
  %v650 = vpop.f32.mrf.mxu0
  %v651 = vadd.f32 0.0, %v650
  %v652 = vpop.f32.mrf.mxu0
  %v653 = vadd.f32 0.0, %v652
  %654 = vmatmul.bf16.gmra.mxu0 %v559
  %v655 = vpop.f32.mrf.mxu0
  %v656 = vadd.f32 0.0, %v655
  %v657 = vpop.f32.mrf.mxu0
  %v658 = vadd.f32 0.0, %v657
  %659 = vmatmul.bf16.gmra.mxu0 %v560
  %v660 = vpop.f32.mrf.mxu0
  %v661 = vadd.f32 0.0, %v660
  %v662 = vpop.f32.mrf.mxu0
  %v663 = vadd.f32 0.0, %v662
  %664 = vmatmul.bf16.gmra.mxu0 %v561
  %v665 = vpop.f32.mrf.mxu0
  %v666 = vadd.f32 0.0, %v665
  %v667 = vpop.f32.mrf.mxu0
  %v668 = vadd.f32 0.0, %v667
  %669 = vmatmul.bf16.gmra.mxu0 %v562
  %v670 = vpop.f32.mrf.mxu0
  %v671 = vadd.f32 0.0, %v670
  %v672 = vpop.f32.mrf.mxu0
  %v673 = vadd.f32 0.0, %v672
  %674 = vmatmul.bf16.gmra.mxu0 %v563
  %v675 = vpop.f32.mrf.mxu0
  %v676 = vadd.f32 0.0, %v675
  %v677 = vpop.f32.mrf.mxu0
  %v678 = vadd.f32 0.0, %v677
  %679 = vdwg.mxu0
  %v680 = vpack.c.bf16 %v643, %v641
  %v681 = vpack.c.bf16 %v648, %v646
  %v682 = vpack.c.bf16 %v653, %v651
  %v683 = vpack.c.bf16 %v658, %v656
  %v684 = vpack.c.bf16 %v663, %v661
  %v685 = vpack.c.bf16 %v668, %v666
  %v686 = vpack.c.bf16 %v673, %v671
  %v687 = vpack.c.bf16 %v678, %v676
  %v689 = vperm.slane %v582, 0
  %691 = vmatpush.bf16.msra.mxu0 %v687
  %692 = vmatpush.bf16.msra.mxu0 %v686
  %693 = vmatpush.bf16.msra.mxu0 %v685
  %694 = vmatpush.bf16.msra.mxu0 %v684
  %695 = vmatpush.bf16.msra.mxu0 %v683
  %696 = vmatpush.bf16.msra.mxu0 %v682
  %697 = vmatpush.bf16.msra.mxu0 %v681
  %698 = vmatpush.bf16.msra.mxu0 %v680
  %699 = vmatmul.bf16.gmra.mxu0 %v275
  %v700 = vpop.f32.mrf.mxu0
  %v701 = vadd.f32 %v689, %v700
  %v702 = vpop.f32.mrf.mxu0
  %v703 = vadd.f32 %v689, %v702
  %704 = vmatmul.bf16.gmra.mxu0 %v276
  %v705 = vpop.f32.mrf.mxu0
  %v706 = vadd.f32 %v689, %v705
  %v707 = vpop.f32.mrf.mxu0
  %v708 = vadd.f32 %v689, %v707
  %709 = vmatmul.bf16.gmra.mxu0 %v277
  %v710 = vpop.f32.mrf.mxu0
  %v711 = vadd.f32 %v689, %v710
  %v712 = vpop.f32.mrf.mxu0
  %v713 = vadd.f32 %v689, %v712
  %714 = vmatmul.bf16.gmra.mxu0 %v278
  %v715 = vpop.f32.mrf.mxu0
  %v716 = vadd.f32 %v689, %v715
  %v717 = vpop.f32.mrf.mxu0
  %v718 = vadd.f32 %v689, %v717
  %719 = vmatmul.bf16.gmra.mxu0 %v279
  %v720 = vpop.f32.mrf.mxu0
  %v721 = vadd.f32 %v689, %v720
  %v722 = vpop.f32.mrf.mxu0
  %v723 = vadd.f32 %v689, %v722
  %724 = vmatmul.bf16.gmra.mxu0 %v280
  %v725 = vpop.f32.mrf.mxu0
  %v726 = vadd.f32 %v689, %v725
  %v727 = vpop.f32.mrf.mxu0
  %v728 = vadd.f32 %v689, %v727
  %729 = vmatmul.bf16.gmra.mxu0 %v281
  %v730 = vpop.f32.mrf.mxu0
  %v731 = vadd.f32 %v689, %v730
  %v732 = vpop.f32.mrf.mxu0
  %v733 = vadd.f32 %v689, %v732
  %734 = vmatmul.bf16.gmra.mxu0 %v282
  %v735 = vpop.f32.mrf.mxu0
  %v736 = vadd.f32 %v689, %v735
  %v737 = vpop.f32.mrf.mxu0
  %v738 = vadd.f32 %v689, %v737
  %739 = vdwg.mxu0
  %v740 = vmax.f32 %v701, 0.0
  %v741 = vmax.f32 %v703, 0.0
  %v742 = vmax.f32 %v706, 0.0
  %v743 = vmax.f32 %v708, 0.0
  %v744 = vmax.f32 %v711, 0.0
  %v745 = vmax.f32 %v713, 0.0
  %v746 = vmax.f32 %v716, 0.0
  %v747 = vmax.f32 %v718, 0.0
  %v748 = vmax.f32 %v721, 0.0
  %v749 = vmax.f32 %v723, 0.0
  %v750 = vmax.f32 %v726, 0.0
  %v751 = vmax.f32 %v728, 0.0
  %v752 = vmax.f32 %v731, 0.0
  %v753 = vmax.f32 %v733, 0.0
  %v754 = vmax.f32 %v736, 0.0
  %v755 = vmax.f32 %v738, 0.0
  %v756 = vpack.c.bf16 %v741, %v740
  %v757 = vpack.c.bf16 %v743, %v742
  %v758 = vpack.c.bf16 %v745, %v744
  %v759 = vpack.c.bf16 %v747, %v746
  %v760 = vpack.c.bf16 %v749, %v748
  %v761 = vpack.c.bf16 %v751, %v750
  %v762 = vpack.c.bf16 %v753, %v752
  %v763 = vpack.c.bf16 %v755, %v754
  %s764 = scalar_lea.vmem %s2, 192
  %v765 = vld [vmem:[%s764] sm:$0xf]
  %v766 = vld [vmem:[%s764 + $0x4] sm:$0xf]
  %v767 = vld [vmem:[%s764 + $0x8] sm:$0xf]
  %v768 = vld [vmem:[%s764 + $0xc] sm:$0xf]
  %v769 = vld [vmem:[%s764 + $0x10] sm:$0xf]
  %v770 = vld [vmem:[%s764 + $0x14] sm:$0xf]
  %v771 = vld [vmem:[%s764 + $0x18] sm:$0xf]
  %v772 = vld [vmem:[%s764 + $0x1c] sm:$0xf]
  %v773 = vld [vmem:[%s764 + $0x20] sm:$0xf]
  %v774 = vld [vmem:[%s764 + $0x24] sm:$0xf]
  %v775 = vld [vmem:[%s764 + $0x28] sm:$0xf]
  %v776 = vld [vmem:[%s764 + $0x2c] sm:$0xf]
  %v777 = vld [vmem:[%s764 + $0x30] sm:$0xf]
  %v778 = vld [vmem:[%s764 + $0x34] sm:$0xf]
  %v779 = vld [vmem:[%s764 + $0x38] sm:$0xf]
  %v780 = vld [vmem:[%s764 + $0x3c] sm:$0xf]
  %s781 = scalar_lea.vmem %s3, 3
  %v782 = vld [vmem:[%s781] sm:$0x1]
  %v799 = vunpack.c.l.b16 %v765
  %v800 = vunpack.c.l.b16 %v766
  %v801 = vunpack.c.l.b16 %v767
  %v802 = vunpack.c.l.b16 %v768
  %v803 = vunpack.c.l.b16 %v769
  %v804 = vunpack.c.l.b16 %v770
  %v805 = vunpack.c.l.b16 %v771
  %v806 = vunpack.c.l.b16 %v772
  %v807 = vunpack.c.l.b16 %v773
  %v808 = vunpack.c.l.b16 %v774
  %v809 = vunpack.c.l.b16 %v775
  %v810 = vunpack.c.l.b16 %v776
  %v811 = vunpack.c.l.b16 %v777
  %v812 = vunpack.c.l.b16 %v778
  %v813 = vunpack.c.l.b16 %v779
  %v814 = vunpack.c.l.b16 %v780
  %v815 = vpack.c.b16 %v800, %v799
  %v816 = vpack.c.b16 %v802, %v801
  %v817 = vpack.c.b16 %v804, %v803
  %v818 = vpack.c.b16 %v806, %v805
  %v819 = vpack.c.b16 %v808, %v807
  %v820 = vpack.c.b16 %v810, %v809
  %v821 = vpack.c.b16 %v812, %v811
  %v822 = vpack.c.b16 %v814, %v813
  %831 = vmatpush.bf16.msra.mxu0 %v822
  %832 = vmatpush.bf16.msra.mxu0 %v821
  %833 = vmatpush.bf16.msra.mxu0 %v820
  %834 = vmatpush.bf16.msra.mxu0 %v819
  %835 = vmatpush.bf16.msra.mxu0 %v818
  %836 = vmatpush.bf16.msra.mxu0 %v817
  %837 = vmatpush.bf16.msra.mxu0 %v816
  %838 = vmatpush.bf16.msra.mxu0 %v815
  %839 = vmatmul.bf16.gmra.mxu0 %v756
  %v840 = vpop.f32.mrf.mxu0
  %v841 = vadd.f32 0.0, %v840
  %v842 = vpop.f32.mrf.mxu0
  %v843 = vadd.f32 0.0, %v842
  %844 = vmatmul.bf16.gmra.mxu0 %v757
  %v845 = vpop.f32.mrf.mxu0
  %v846 = vadd.f32 0.0, %v845
  %v847 = vpop.f32.mrf.mxu0
  %v848 = vadd.f32 0.0, %v847
  %849 = vmatmul.bf16.gmra.mxu0 %v758
  %v850 = vpop.f32.mrf.mxu0
  %v851 = vadd.f32 0.0, %v850
  %v852 = vpop.f32.mrf.mxu0
  %v853 = vadd.f32 0.0, %v852
  %854 = vmatmul.bf16.gmra.mxu0 %v759
  %v855 = vpop.f32.mrf.mxu0
  %v856 = vadd.f32 0.0, %v855
  %v857 = vpop.f32.mrf.mxu0
  %v858 = vadd.f32 0.0, %v857
  %859 = vmatmul.bf16.gmra.mxu0 %v760
  %v860 = vpop.f32.mrf.mxu0
  %v861 = vadd.f32 0.0, %v860
  %v862 = vpop.f32.mrf.mxu0
  %v863 = vadd.f32 0.0, %v862
  %864 = vmatmul.bf16.gmra.mxu0 %v761
  %v865 = vpop.f32.mrf.mxu0
  %v866 = vadd.f32 0.0, %v865
  %v867 = vpop.f32.mrf.mxu0
  %v868 = vadd.f32 0.0, %v867
  %869 = vmatmul.bf16.gmra.mxu0 %v762
  %v870 = vpop.f32.mrf.mxu0
  %v871 = vadd.f32 0.0, %v870
  %v872 = vpop.f32.mrf.mxu0
  %v873 = vadd.f32 0.0, %v872
  %874 = vmatmul.bf16.gmra.mxu0 %v763
  %v875 = vpop.f32.mrf.mxu0
  %v876 = vadd.f32 0.0, %v875
  %v877 = vpop.f32.mrf.mxu0
  %v878 = vadd.f32 0.0, %v877
  %879 = vdwg.mxu0
  %v880 = vpack.c.bf16 %v843, %v841
  %v881 = vpack.c.bf16 %v848, %v846
  %v882 = vpack.c.bf16 %v853, %v851
  %v883 = vpack.c.bf16 %v858, %v856
  %v884 = vpack.c.bf16 %v863, %v861
  %v885 = vpack.c.bf16 %v868, %v866
  %v886 = vpack.c.bf16 %v873, %v871
  %v887 = vpack.c.bf16 %v878, %v876
  %v889 = vperm.slane %v782, 0
  %891 = vmatpush.bf16.msra.mxu0 %v887
  %892 = vmatpush.bf16.msra.mxu0 %v886
  %893 = vmatpush.bf16.msra.mxu0 %v885
  %894 = vmatpush.bf16.msra.mxu0 %v884
  %895 = vmatpush.bf16.msra.mxu0 %v883
  %896 = vmatpush.bf16.msra.mxu0 %v882
  %897 = vmatpush.bf16.msra.mxu0 %v881
  %898 = vmatpush.bf16.msra.mxu0 %v880
  %899 = vmatmul.bf16.gmra.mxu0 %v275
  %v900 = vpop.f32.mrf.mxu0
  %v901 = vadd.f32 %v889, %v900
  %v902 = vpop.f32.mrf.mxu0
  %v903 = vadd.f32 %v889, %v902
  %904 = vmatmul.bf16.gmra.mxu0 %v276
  %v905 = vpop.f32.mrf.mxu0
  %v906 = vadd.f32 %v889, %v905
  %v907 = vpop.f32.mrf.mxu0
  %v908 = vadd.f32 %v889, %v907
  %909 = vmatmul.bf16.gmra.mxu0 %v277
  %v910 = vpop.f32.mrf.mxu0
  %v911 = vadd.f32 %v889, %v910
  %v912 = vpop.f32.mrf.mxu0
  %v913 = vadd.f32 %v889, %v912
  %914 = vmatmul.bf16.gmra.mxu0 %v278
  %v915 = vpop.f32.mrf.mxu0
  %v916 = vadd.f32 %v889, %v915
  %v917 = vpop.f32.mrf.mxu0
  %v918 = vadd.f32 %v889, %v917
  %919 = vmatmul.bf16.gmra.mxu0 %v279
  %v920 = vpop.f32.mrf.mxu0
  %v921 = vadd.f32 %v889, %v920
  %v922 = vpop.f32.mrf.mxu0
  %v923 = vadd.f32 %v889, %v922
  %924 = vmatmul.bf16.gmra.mxu0 %v280
  %v925 = vpop.f32.mrf.mxu0
  %v926 = vadd.f32 %v889, %v925
  %v927 = vpop.f32.mrf.mxu0
  %v928 = vadd.f32 %v889, %v927
  %929 = vmatmul.bf16.gmra.mxu0 %v281
  %v930 = vpop.f32.mrf.mxu0
  %v931 = vadd.f32 %v889, %v930
  %v932 = vpop.f32.mrf.mxu0
  %v933 = vadd.f32 %v889, %v932
  %934 = vmatmul.bf16.gmra.mxu0 %v282
  %v935 = vpop.f32.mrf.mxu0
  %v936 = vadd.f32 %v889, %v935
  %v937 = vpop.f32.mrf.mxu0
  %v938 = vadd.f32 %v889, %v937
  %939 = vdwg.mxu0
  %v940 = vmax.f32 %v901, 0.0
  %v941 = vmax.f32 %v903, 0.0
  %v942 = vmax.f32 %v906, 0.0
  %v943 = vmax.f32 %v908, 0.0
  %v944 = vmax.f32 %v911, 0.0
  %v945 = vmax.f32 %v913, 0.0
  %v946 = vmax.f32 %v916, 0.0
  %v947 = vmax.f32 %v918, 0.0
  %v948 = vmax.f32 %v921, 0.0
  %v949 = vmax.f32 %v923, 0.0
  %v950 = vmax.f32 %v926, 0.0
  %v951 = vmax.f32 %v928, 0.0
  %v952 = vmax.f32 %v931, 0.0
  %v953 = vmax.f32 %v933, 0.0
  %v954 = vmax.f32 %v936, 0.0
  %v955 = vmax.f32 %v938, 0.0
  %v956 = vpack.c.bf16 %v940, %v940
  %v957 = vpack.c.bf16 %v941, %v941
  %v958 = vpack.c.bf16 %v942, %v942
  %v959 = vpack.c.bf16 %v943, %v943
  %v960 = vpack.c.bf16 %v944, %v944
  %v961 = vpack.c.bf16 %v945, %v945
  %v962 = vpack.c.bf16 %v946, %v946
  %v963 = vpack.c.bf16 %v947, %v947
  %v964 = vpack.c.bf16 %v948, %v948
  %v965 = vpack.c.bf16 %v949, %v949
  %v966 = vpack.c.bf16 %v950, %v950
  %v967 = vpack.c.bf16 %v951, %v951
  %v968 = vpack.c.bf16 %v952, %v952
  %v969 = vpack.c.bf16 %v953, %v953
  %v970 = vpack.c.bf16 %v954, %v954
  %v971 = vpack.c.bf16 %v955, %v955
  %v972 = vld [vmem:[%s4] sm:$0xf]
  %v973 = vld [vmem:[%s4 + $0x4] sm:$0xf]
  %v974 = vld [vmem:[%s4 + $0x8] sm:$0xf]
  %v975 = vld [vmem:[%s4 + $0xc] sm:$0xf]
  %v976 = vld [vmem:[%s4 + $0x10] sm:$0xf]
  %v977 = vld [vmem:[%s4 + $0x14] sm:$0xf]
  %v978 = vld [vmem:[%s4 + $0x18] sm:$0xf]
  %v979 = vld [vmem:[%s4 + $0x1c] sm:$0xf]
  %v980 = vld [vmem:[%s4 + $0x20] sm:$0xf]
  %v981 = vld [vmem:[%s4 + $0x24] sm:$0xf]
  %v982 = vld [vmem:[%s4 + $0x28] sm:$0xf]
  %v983 = vld [vmem:[%s4 + $0x2c] sm:$0xf]
  %v984 = vld [vmem:[%s4 + $0x30] sm:$0xf]
  %v985 = vld [vmem:[%s4 + $0x34] sm:$0xf]
  %v986 = vld [vmem:[%s4 + $0x38] sm:$0xf]
  %v987 = vld [vmem:[%s4 + $0x3c] sm:$0xf]
  %989 = vset.pattern.permute.xlu0 0
  %990 = vperm.xlu0 %989, %v972
  %v991 = vpop.permute.xlu0 %990
  %v994 = vunpack.c.l.s4 839922192
  %v995 = vunpack.c.0.s8 %v994
  %v996 = vperm.slane %v991, %v995
  %998 = vset.pattern.permute.xlu0 0
  %999 = vperm.xlu0 %998, %v973
  %v1000 = vpop.permute.xlu0 %999
  %v1003 = vunpack.c.l.s4 839922192
  %v1004 = vunpack.c.0.s8 %v1003
  %v1005 = vperm.slane %v1000, %v1004
  %1007 = vset.pattern.permute.xlu0 0
  %1008 = vperm.xlu0 %1007, %v974
  %v1009 = vpop.permute.xlu0 %1008
  %v1012 = vunpack.c.l.s4 839922192
  %v1013 = vunpack.c.0.s8 %v1012
  %v1014 = vperm.slane %v1009, %v1013
  %1016 = vset.pattern.permute.xlu0 0
  %1017 = vperm.xlu0 %1016, %v975
  %v1018 = vpop.permute.xlu0 %1017
  %v1021 = vunpack.c.l.s4 839922192
  %v1022 = vunpack.c.0.s8 %v1021
  %v1023 = vperm.slane %v1018, %v1022
  %1025 = vset.pattern.permute.xlu0 0
  %1026 = vperm.xlu0 %1025, %v976
  %v1027 = vpop.permute.xlu0 %1026
  %v1030 = vunpack.c.l.s4 839922192
  %v1031 = vunpack.c.0.s8 %v1030
  %v1032 = vperm.slane %v1027, %v1031
  %1034 = vset.pattern.permute.xlu0 0
  %1035 = vperm.xlu0 %1034, %v977
  %v1036 = vpop.permute.xlu0 %1035
  %v1039 = vunpack.c.l.s4 839922192
  %v1040 = vunpack.c.0.s8 %v1039
  %v1041 = vperm.slane %v1036, %v1040
  %1043 = vset.pattern.permute.xlu0 0
  %1044 = vperm.xlu0 %1043, %v978
  %v1045 = vpop.permute.xlu0 %1044
  %v1048 = vunpack.c.l.s4 839922192
  %v1049 = vunpack.c.0.s8 %v1048
  %v1050 = vperm.slane %v1045, %v1049
  %1052 = vset.pattern.permute.xlu0 0
  %1053 = vperm.xlu0 %1052, %v979
  %v1054 = vpop.permute.xlu0 %1053
  %v1057 = vunpack.c.l.s4 839922192
  %v1058 = vunpack.c.0.s8 %v1057
  %v1059 = vperm.slane %v1054, %v1058
  %1061 = vset.pattern.permute.xlu0 0
  %1062 = vperm.xlu0 %1061, %v980
  %v1063 = vpop.permute.xlu0 %1062
  %v1066 = vunpack.c.l.s4 839922192
  %v1067 = vunpack.c.0.s8 %v1066
  %v1068 = vperm.slane %v1063, %v1067
  %1070 = vset.pattern.permute.xlu0 0
  %1071 = vperm.xlu0 %1070, %v981
  %v1072 = vpop.permute.xlu0 %1071
  %v1075 = vunpack.c.l.s4 839922192
  %v1076 = vunpack.c.0.s8 %v1075
  %v1077 = vperm.slane %v1072, %v1076
  %1079 = vset.pattern.permute.xlu0 0
  %1080 = vperm.xlu0 %1079, %v982
  %v1081 = vpop.permute.xlu0 %1080
  %v1084 = vunpack.c.l.s4 839922192
  %v1085 = vunpack.c.0.s8 %v1084
  %v1086 = vperm.slane %v1081, %v1085
  %1088 = vset.pattern.permute.xlu0 0
  %1089 = vperm.xlu0 %1088, %v983
  %v1090 = vpop.permute.xlu0 %1089
  %v1093 = vunpack.c.l.s4 839922192
  %v1094 = vunpack.c.0.s8 %v1093
  %v1095 = vperm.slane %v1090, %v1094
  %1097 = vset.pattern.permute.xlu0 0
  %1098 = vperm.xlu0 %1097, %v984
  %v1099 = vpop.permute.xlu0 %1098
  %v1102 = vunpack.c.l.s4 839922192
  %v1103 = vunpack.c.0.s8 %v1102
  %v1104 = vperm.slane %v1099, %v1103
  %1106 = vset.pattern.permute.xlu0 0
  %1107 = vperm.xlu0 %1106, %v985
  %v1108 = vpop.permute.xlu0 %1107
  %v1111 = vunpack.c.l.s4 839922192
  %v1112 = vunpack.c.0.s8 %v1111
  %v1113 = vperm.slane %v1108, %v1112
  %1115 = vset.pattern.permute.xlu0 0
  %1116 = vperm.xlu0 %1115, %v986
  %v1117 = vpop.permute.xlu0 %1116
  %v1120 = vunpack.c.l.s4 839922192
  %v1121 = vunpack.c.0.s8 %v1120
  %v1122 = vperm.slane %v1117, %v1121
  %1124 = vset.pattern.permute.xlu0 0
  %1125 = vperm.xlu0 %1124, %v987
  %v1126 = vpop.permute.xlu0 %1125
  %v1129 = vunpack.c.l.s4 839922192
  %v1130 = vunpack.c.0.s8 %v1129
  %v1131 = vperm.slane %v1126, %v1130
  %v1132 = vunpack.c.l.bf16 %v956
  %v1133 = vunpack.c.l.bf16 %v957
  %v1134 = vunpack.c.l.bf16 %v958
  %v1135 = vunpack.c.l.bf16 %v959
  %v1136 = vunpack.c.l.bf16 %v960
  %v1137 = vunpack.c.l.bf16 %v961
  %v1138 = vunpack.c.l.bf16 %v962
  %v1139 = vunpack.c.l.bf16 %v963
  %v1140 = vunpack.c.l.bf16 %v964
  %v1141 = vunpack.c.l.bf16 %v965
  %v1142 = vunpack.c.l.bf16 %v966
  %v1143 = vunpack.c.l.bf16 %v967
  %v1144 = vunpack.c.l.bf16 %v968
  %v1145 = vunpack.c.l.bf16 %v969
  %v1146 = vunpack.c.l.bf16 %v970
  %v1147 = vunpack.c.l.bf16 %v971
  %v1148 = vunpack.c.l.bf16 %v996
  %v1149 = vunpack.c.l.bf16 %v1005
  %v1150 = vunpack.c.l.bf16 %v1014
  %v1151 = vunpack.c.l.bf16 %v1023
  %v1152 = vunpack.c.l.bf16 %v1032
  %v1153 = vunpack.c.l.bf16 %v1041
  %v1154 = vunpack.c.l.bf16 %v1050
  %v1155 = vunpack.c.l.bf16 %v1059
  %v1156 = vunpack.c.l.bf16 %v1068
  %v1157 = vunpack.c.l.bf16 %v1077
  %v1158 = vunpack.c.l.bf16 %v1086
  %v1159 = vunpack.c.l.bf16 %v1095
  %v1160 = vunpack.c.l.bf16 %v1104
  %v1161 = vunpack.c.l.bf16 %v1113
  %v1162 = vunpack.c.l.bf16 %v1122
  %v1163 = vunpack.c.l.bf16 %v1131
  %v1164 = vmul.f32 %v1132, %v1148
  %v1165 = vmul.f32 %v1133, %v1149
  %v1166 = vmul.f32 %v1134, %v1150
  %v1167 = vmul.f32 %v1135, %v1151
  %v1168 = vmul.f32 %v1136, %v1152
  %v1169 = vmul.f32 %v1137, %v1153
  %v1170 = vmul.f32 %v1138, %v1154
  %v1171 = vmul.f32 %v1139, %v1155
  %v1172 = vmul.f32 %v1140, %v1156
  %v1173 = vmul.f32 %v1141, %v1157
  %v1174 = vmul.f32 %v1142, %v1158
  %v1175 = vmul.f32 %v1143, %v1159
  %v1176 = vmul.f32 %v1144, %v1160
  %v1177 = vmul.f32 %v1145, %v1161
  %v1178 = vmul.f32 %v1146, %v1162
  %v1179 = vmul.f32 %v1147, %v1163
  %v1180 = vpack.c.bf16 %v1165, %v1164
  %v1181 = vpack.c.bf16 %v1167, %v1166
  %v1182 = vpack.c.bf16 %v1169, %v1168
  %v1183 = vpack.c.bf16 %v1171, %v1170
  %v1184 = vpack.c.bf16 %v1173, %v1172
  %v1185 = vpack.c.bf16 %v1175, %v1174
  %v1186 = vpack.c.bf16 %v1177, %v1176
  %v1187 = vpack.c.bf16 %v1179, %v1178
  %v1188 = vunpack.c.l.bf16 %v1180
  %v1189 = vunpack.c.h.bf16 %v1180
  %v1190 = vunpack.c.l.bf16 %v1181
  %v1191 = vunpack.c.h.bf16 %v1181
  %v1192 = vunpack.c.l.bf16 %v1182
  %v1193 = vunpack.c.h.bf16 %v1182
  %v1194 = vunpack.c.l.bf16 %v1183
  %v1195 = vunpack.c.h.bf16 %v1183
  %v1196 = vunpack.c.l.bf16 %v1184
  %v1197 = vunpack.c.h.bf16 %v1184
  %v1198 = vunpack.c.l.bf16 %v1185
  %v1199 = vunpack.c.h.bf16 %v1185
  %v1200 = vunpack.c.l.bf16 %v1186
  %v1201 = vunpack.c.h.bf16 %v1186
  %v1202 = vunpack.c.l.bf16 %v1187
  %v1203 = vunpack.c.h.bf16 %v1187
  %v1204 = vmax.f32 %v1188, %v1192
  %v1205 = vmax.f32 %v1189, %v1193
  %v1206 = vmax.f32 %v1190, %v1194
  %v1207 = vmax.f32 %v1191, %v1195
  %v1208 = vmax.f32 %v1204, %v1196
  %v1209 = vmax.f32 %v1205, %v1197
  %v1210 = vmax.f32 %v1206, %v1198
  %v1211 = vmax.f32 %v1207, %v1199
  %v1212 = vmax.f32 %v1208, %v1200
  %v1213 = vmax.f32 %v1209, %v1201
  %v1214 = vmax.f32 %v1210, %v1202
  %v1215 = vmax.f32 %v1211, %v1203
  %v1216 = vmax.f32 %v1212, %v1213
  %v1217 = vmax.f32 %v1214, %v1215
  %v1218 = vmax.f32 %v1216, %v1217
  %v1219 = vrot.slane %v1218, 4
  %v1220 = vmax.f32 %v1218, %v1219
  %v1221 = vrot.slane %v1220, 2
  %v1222 = vmax.f32 %v1220, %v1221
  %v1223 = vrot.slane %v1222, 1
  %v1224 = vmax.f32 %v1222, %v1223
  %v1225 = vpack.c.bf16 %v1224, %v1224
  %1226 = vset.pattern.permute.xlu0 1
  %1227 = vperm.xlu0 %1226, %v972
  %v1228 = vpop.permute.xlu0 %1227
  %v1231 = vunpack.c.l.s4 839922192
  %v1232 = vunpack.c.0.s8 %v1231
  %v1233 = vperm.slane %v1228, %v1232
  %1234 = vset.pattern.permute.xlu0 1
  %1235 = vperm.xlu0 %1234, %v973
  %v1236 = vpop.permute.xlu0 %1235
  %v1239 = vunpack.c.l.s4 839922192
  %v1240 = vunpack.c.0.s8 %v1239
  %v1241 = vperm.slane %v1236, %v1240
  %1242 = vset.pattern.permute.xlu0 1
  %1243 = vperm.xlu0 %1242, %v974
  %v1244 = vpop.permute.xlu0 %1243
  %v1247 = vunpack.c.l.s4 839922192
  %v1248 = vunpack.c.0.s8 %v1247
  %v1249 = vperm.slane %v1244, %v1248
  %1250 = vset.pattern.permute.xlu0 1
  %1251 = vperm.xlu0 %1250, %v975
  %v1252 = vpop.permute.xlu0 %1251
  %v1255 = vunpack.c.l.s4 839922192
  %v1256 = vunpack.c.0.s8 %v1255
  %v1257 = vperm.slane %v1252, %v1256
  %1258 = vset.pattern.permute.xlu0 1
  %1259 = vperm.xlu0 %1258, %v976
  %v1260 = vpop.permute.xlu0 %1259
  %v1263 = vunpack.c.l.s4 839922192
  %v1264 = vunpack.c.0.s8 %v1263
  %v1265 = vperm.slane %v1260, %v1264
  %1266 = vset.pattern.permute.xlu0 1
  %1267 = vperm.xlu0 %1266, %v977
  %v1268 = vpop.permute.xlu0 %1267
  %v1271 = vunpack.c.l.s4 839922192
  %v1272 = vunpack.c.0.s8 %v1271
  %v1273 = vperm.slane %v1268, %v1272
  %1274 = vset.pattern.permute.xlu0 1
  %1275 = vperm.xlu0 %1274, %v978
  %v1276 = vpop.permute.xlu0 %1275
  %v1279 = vunpack.c.l.s4 839922192
  %v1280 = vunpack.c.0.s8 %v1279
  %v1281 = vperm.slane %v1276, %v1280
  %1282 = vset.pattern.permute.xlu0 1
  %1283 = vperm.xlu0 %1282, %v979
  %v1284 = vpop.permute.xlu0 %1283
  %v1287 = vunpack.c.l.s4 839922192
  %v1288 = vunpack.c.0.s8 %v1287
  %v1289 = vperm.slane %v1284, %v1288
  %1290 = vset.pattern.permute.xlu0 1
  %1291 = vperm.xlu0 %1290, %v980
  %v1292 = vpop.permute.xlu0 %1291
  %v1295 = vunpack.c.l.s4 839922192
  %v1296 = vunpack.c.0.s8 %v1295
  %v1297 = vperm.slane %v1292, %v1296
  %1298 = vset.pattern.permute.xlu0 1
  %1299 = vperm.xlu0 %1298, %v981
  %v1300 = vpop.permute.xlu0 %1299
  %v1303 = vunpack.c.l.s4 839922192
  %v1304 = vunpack.c.0.s8 %v1303
  %v1305 = vperm.slane %v1300, %v1304
  %1306 = vset.pattern.permute.xlu0 1
  %1307 = vperm.xlu0 %1306, %v982
  %v1308 = vpop.permute.xlu0 %1307
  %v1311 = vunpack.c.l.s4 839922192
  %v1312 = vunpack.c.0.s8 %v1311
  %v1313 = vperm.slane %v1308, %v1312
  %1314 = vset.pattern.permute.xlu0 1
  %1315 = vperm.xlu0 %1314, %v983
  %v1316 = vpop.permute.xlu0 %1315
  %v1319 = vunpack.c.l.s4 839922192
  %v1320 = vunpack.c.0.s8 %v1319
  %v1321 = vperm.slane %v1316, %v1320
  %1322 = vset.pattern.permute.xlu0 1
  %1323 = vperm.xlu0 %1322, %v984
  %v1324 = vpop.permute.xlu0 %1323
  %v1327 = vunpack.c.l.s4 839922192
  %v1328 = vunpack.c.0.s8 %v1327
  %v1329 = vperm.slane %v1324, %v1328
  %1330 = vset.pattern.permute.xlu0 1
  %1331 = vperm.xlu0 %1330, %v985
  %v1332 = vpop.permute.xlu0 %1331
  %v1335 = vunpack.c.l.s4 839922192
  %v1336 = vunpack.c.0.s8 %v1335
  %v1337 = vperm.slane %v1332, %v1336
  %1338 = vset.pattern.permute.xlu0 1
  %1339 = vperm.xlu0 %1338, %v986
  %v1340 = vpop.permute.xlu0 %1339
  %v1343 = vunpack.c.l.s4 839922192
  %v1344 = vunpack.c.0.s8 %v1343
  %v1345 = vperm.slane %v1340, %v1344
  %1346 = vset.pattern.permute.xlu0 1
  %1347 = vperm.xlu0 %1346, %v987
  %v1348 = vpop.permute.xlu0 %1347
  %v1351 = vunpack.c.l.s4 839922192
  %v1352 = vunpack.c.0.s8 %v1351
  %v1353 = vperm.slane %v1348, %v1352
  %v1354 = vunpack.c.l.bf16 %v1233
  %v1355 = vunpack.c.l.bf16 %v1241
  %v1356 = vunpack.c.l.bf16 %v1249
  %v1357 = vunpack.c.l.bf16 %v1257
  %v1358 = vunpack.c.l.bf16 %v1265
  %v1359 = vunpack.c.l.bf16 %v1273
  %v1360 = vunpack.c.l.bf16 %v1281
  %v1361 = vunpack.c.l.bf16 %v1289
  %v1362 = vunpack.c.l.bf16 %v1297
  %v1363 = vunpack.c.l.bf16 %v1305
  %v1364 = vunpack.c.l.bf16 %v1313
  %v1365 = vunpack.c.l.bf16 %v1321
  %v1366 = vunpack.c.l.bf16 %v1329
  %v1367 = vunpack.c.l.bf16 %v1337
  %v1368 = vunpack.c.l.bf16 %v1345
  %v1369 = vunpack.c.l.bf16 %v1353
  %v1370 = vmul.f32 %v1132, %v1354
  %v1371 = vmul.f32 %v1133, %v1355
  %v1372 = vmul.f32 %v1134, %v1356
  %v1373 = vmul.f32 %v1135, %v1357
  %v1374 = vmul.f32 %v1136, %v1358
  %v1375 = vmul.f32 %v1137, %v1359
  %v1376 = vmul.f32 %v1138, %v1360
  %v1377 = vmul.f32 %v1139, %v1361
  %v1378 = vmul.f32 %v1140, %v1362
  %v1379 = vmul.f32 %v1141, %v1363
  %v1380 = vmul.f32 %v1142, %v1364
  %v1381 = vmul.f32 %v1143, %v1365
  %v1382 = vmul.f32 %v1144, %v1366
  %v1383 = vmul.f32 %v1145, %v1367
  %v1384 = vmul.f32 %v1146, %v1368
  %v1385 = vmul.f32 %v1147, %v1369
  %v1386 = vpack.c.bf16 %v1371, %v1370
  %v1387 = vpack.c.bf16 %v1373, %v1372
  %v1388 = vpack.c.bf16 %v1375, %v1374
  %v1389 = vpack.c.bf16 %v1377, %v1376
  %v1390 = vpack.c.bf16 %v1379, %v1378
  %v1391 = vpack.c.bf16 %v1381, %v1380
  %v1392 = vpack.c.bf16 %v1383, %v1382
  %v1393 = vpack.c.bf16 %v1385, %v1384
  %v1394 = vunpack.c.l.bf16 %v1386
  %v1395 = vunpack.c.h.bf16 %v1386
  %v1396 = vunpack.c.l.bf16 %v1387
  %v1397 = vunpack.c.h.bf16 %v1387
  %v1398 = vunpack.c.l.bf16 %v1388
  %v1399 = vunpack.c.h.bf16 %v1388
  %v1400 = vunpack.c.l.bf16 %v1389
  %v1401 = vunpack.c.h.bf16 %v1389
  %v1402 = vunpack.c.l.bf16 %v1390
  %v1403 = vunpack.c.h.bf16 %v1390
  %v1404 = vunpack.c.l.bf16 %v1391
  %v1405 = vunpack.c.h.bf16 %v1391
  %v1406 = vunpack.c.l.bf16 %v1392
  %v1407 = vunpack.c.h.bf16 %v1392
  %v1408 = vunpack.c.l.bf16 %v1393
  %v1409 = vunpack.c.h.bf16 %v1393
  %v1410 = vmax.f32 %v1394, %v1398
  %v1411 = vmax.f32 %v1395, %v1399
  %v1412 = vmax.f32 %v1396, %v1400
  %v1413 = vmax.f32 %v1397, %v1401
  %v1414 = vmax.f32 %v1410, %v1402
  %v1415 = vmax.f32 %v1411, %v1403
  %v1416 = vmax.f32 %v1412, %v1404
  %v1417 = vmax.f32 %v1413, %v1405
  %v1418 = vmax.f32 %v1414, %v1406
  %v1419 = vmax.f32 %v1415, %v1407
  %v1420 = vmax.f32 %v1416, %v1408
  %v1421 = vmax.f32 %v1417, %v1409
  %v1422 = vmax.f32 %v1418, %v1419
  %v1423 = vmax.f32 %v1420, %v1421
  %v1424 = vmax.f32 %v1422, %v1423
  %v1425 = vrot.slane %v1424, 4
  %v1426 = vmax.f32 %v1424, %v1425
  %v1427 = vrot.slane %v1426, 2
  %v1428 = vmax.f32 %v1426, %v1427
  %v1429 = vrot.slane %v1428, 1
  %v1430 = vmax.f32 %v1428, %v1429
  %v1431 = vpack.c.bf16 %v1430, %v1430
  %1432 = vset.pattern.permute.xlu0 2
  %1433 = vperm.xlu0 %1432, %v972
  %v1434 = vpop.permute.xlu0 %1433
  %v1437 = vunpack.c.l.s4 839922192
  %v1438 = vunpack.c.0.s8 %v1437
  %v1439 = vperm.slane %v1434, %v1438
  %1440 = vset.pattern.permute.xlu0 2
  %1441 = vperm.xlu0 %1440, %v973
  %v1442 = vpop.permute.xlu0 %1441
  %v1445 = vunpack.c.l.s4 839922192
  %v1446 = vunpack.c.0.s8 %v1445
  %v1447 = vperm.slane %v1442, %v1446
  %1448 = vset.pattern.permute.xlu0 2
  %1449 = vperm.xlu0 %1448, %v974
  %v1450 = vpop.permute.xlu0 %1449
  %v1453 = vunpack.c.l.s4 839922192
  %v1454 = vunpack.c.0.s8 %v1453
  %v1455 = vperm.slane %v1450, %v1454
  %1456 = vset.pattern.permute.xlu0 2
  %1457 = vperm.xlu0 %1456, %v975
  %v1458 = vpop.permute.xlu0 %1457
  %v1461 = vunpack.c.l.s4 839922192
  %v1462 = vunpack.c.0.s8 %v1461
  %v1463 = vperm.slane %v1458, %v1462
  %1464 = vset.pattern.permute.xlu0 2
  %1465 = vperm.xlu0 %1464, %v976
  %v1466 = vpop.permute.xlu0 %1465
  %v1469 = vunpack.c.l.s4 839922192
  %v1470 = vunpack.c.0.s8 %v1469
  %v1471 = vperm.slane %v1466, %v1470
  %1472 = vset.pattern.permute.xlu0 2
  %1473 = vperm.xlu0 %1472, %v977
  %v1474 = vpop.permute.xlu0 %1473
  %v1477 = vunpack.c.l.s4 839922192
  %v1478 = vunpack.c.0.s8 %v1477
  %v1479 = vperm.slane %v1474, %v1478
  %1480 = vset.pattern.permute.xlu0 2
  %1481 = vperm.xlu0 %1480, %v978
  %v1482 = vpop.permute.xlu0 %1481
  %v1485 = vunpack.c.l.s4 839922192
  %v1486 = vunpack.c.0.s8 %v1485
  %v1487 = vperm.slane %v1482, %v1486
  %1488 = vset.pattern.permute.xlu0 2
  %1489 = vperm.xlu0 %1488, %v979
  %v1490 = vpop.permute.xlu0 %1489
  %v1493 = vunpack.c.l.s4 839922192
  %v1494 = vunpack.c.0.s8 %v1493
  %v1495 = vperm.slane %v1490, %v1494
  %1496 = vset.pattern.permute.xlu0 2
  %1497 = vperm.xlu0 %1496, %v980
  %v1498 = vpop.permute.xlu0 %1497
  %v1501 = vunpack.c.l.s4 839922192
  %v1502 = vunpack.c.0.s8 %v1501
  %v1503 = vperm.slane %v1498, %v1502
  %1504 = vset.pattern.permute.xlu0 2
  %1505 = vperm.xlu0 %1504, %v981
  %v1506 = vpop.permute.xlu0 %1505
  %v1509 = vunpack.c.l.s4 839922192
  %v1510 = vunpack.c.0.s8 %v1509
  %v1511 = vperm.slane %v1506, %v1510
  %1512 = vset.pattern.permute.xlu0 2
  %1513 = vperm.xlu0 %1512, %v982
  %v1514 = vpop.permute.xlu0 %1513
  %v1517 = vunpack.c.l.s4 839922192
  %v1518 = vunpack.c.0.s8 %v1517
  %v1519 = vperm.slane %v1514, %v1518
  %1520 = vset.pattern.permute.xlu0 2
  %1521 = vperm.xlu0 %1520, %v983
  %v1522 = vpop.permute.xlu0 %1521
  %v1525 = vunpack.c.l.s4 839922192
  %v1526 = vunpack.c.0.s8 %v1525
  %v1527 = vperm.slane %v1522, %v1526
  %1528 = vset.pattern.permute.xlu0 2
  %1529 = vperm.xlu0 %1528, %v984
  %v1530 = vpop.permute.xlu0 %1529
  %v1533 = vunpack.c.l.s4 839922192
  %v1534 = vunpack.c.0.s8 %v1533
  %v1535 = vperm.slane %v1530, %v1534
  %1536 = vset.pattern.permute.xlu0 2
  %1537 = vperm.xlu0 %1536, %v985
  %v1538 = vpop.permute.xlu0 %1537
  %v1541 = vunpack.c.l.s4 839922192
  %v1542 = vunpack.c.0.s8 %v1541
  %v1543 = vperm.slane %v1538, %v1542
  %1544 = vset.pattern.permute.xlu0 2
  %1545 = vperm.xlu0 %1544, %v986
  %v1546 = vpop.permute.xlu0 %1545
  %v1549 = vunpack.c.l.s4 839922192
  %v1550 = vunpack.c.0.s8 %v1549
  %v1551 = vperm.slane %v1546, %v1550
  %1552 = vset.pattern.permute.xlu0 2
  %1553 = vperm.xlu0 %1552, %v987
  %v1554 = vpop.permute.xlu0 %1553
  %v1557 = vunpack.c.l.s4 839922192
  %v1558 = vunpack.c.0.s8 %v1557
  %v1559 = vperm.slane %v1554, %v1558
  %v1560 = vunpack.c.l.bf16 %v1439
  %v1561 = vunpack.c.l.bf16 %v1447
  %v1562 = vunpack.c.l.bf16 %v1455
  %v1563 = vunpack.c.l.bf16 %v1463
  %v1564 = vunpack.c.l.bf16 %v1471
  %v1565 = vunpack.c.l.bf16 %v1479
  %v1566 = vunpack.c.l.bf16 %v1487
  %v1567 = vunpack.c.l.bf16 %v1495
  %v1568 = vunpack.c.l.bf16 %v1503
  %v1569 = vunpack.c.l.bf16 %v1511
  %v1570 = vunpack.c.l.bf16 %v1519
  %v1571 = vunpack.c.l.bf16 %v1527
  %v1572 = vunpack.c.l.bf16 %v1535
  %v1573 = vunpack.c.l.bf16 %v1543
  %v1574 = vunpack.c.l.bf16 %v1551
  %v1575 = vunpack.c.l.bf16 %v1559
  %v1576 = vmul.f32 %v1132, %v1560
  %v1577 = vmul.f32 %v1133, %v1561
  %v1578 = vmul.f32 %v1134, %v1562
  %v1579 = vmul.f32 %v1135, %v1563
  %v1580 = vmul.f32 %v1136, %v1564
  %v1581 = vmul.f32 %v1137, %v1565
  %v1582 = vmul.f32 %v1138, %v1566
  %v1583 = vmul.f32 %v1139, %v1567
  %v1584 = vmul.f32 %v1140, %v1568
  %v1585 = vmul.f32 %v1141, %v1569
  %v1586 = vmul.f32 %v1142, %v1570
  %v1587 = vmul.f32 %v1143, %v1571
  %v1588 = vmul.f32 %v1144, %v1572
  %v1589 = vmul.f32 %v1145, %v1573
  %v1590 = vmul.f32 %v1146, %v1574
  %v1591 = vmul.f32 %v1147, %v1575
  %v1592 = vpack.c.bf16 %v1577, %v1576
  %v1593 = vpack.c.bf16 %v1579, %v1578
  %v1594 = vpack.c.bf16 %v1581, %v1580
  %v1595 = vpack.c.bf16 %v1583, %v1582
  %v1596 = vpack.c.bf16 %v1585, %v1584
  %v1597 = vpack.c.bf16 %v1587, %v1586
  %v1598 = vpack.c.bf16 %v1589, %v1588
  %v1599 = vpack.c.bf16 %v1591, %v1590
  %v1600 = vunpack.c.l.bf16 %v1592
  %v1601 = vunpack.c.h.bf16 %v1592
  %v1602 = vunpack.c.l.bf16 %v1593
  %v1603 = vunpack.c.h.bf16 %v1593
  %v1604 = vunpack.c.l.bf16 %v1594
  %v1605 = vunpack.c.h.bf16 %v1594
  %v1606 = vunpack.c.l.bf16 %v1595
  %v1607 = vunpack.c.h.bf16 %v1595
  %v1608 = vunpack.c.l.bf16 %v1596
  %v1609 = vunpack.c.h.bf16 %v1596
  %v1610 = vunpack.c.l.bf16 %v1597
  %v1611 = vunpack.c.h.bf16 %v1597
  %v1612 = vunpack.c.l.bf16 %v1598
  %v1613 = vunpack.c.h.bf16 %v1598
  %v1614 = vunpack.c.l.bf16 %v1599
  %v1615 = vunpack.c.h.bf16 %v1599
  %v1616 = vmax.f32 %v1600, %v1604
  %v1617 = vmax.f32 %v1601, %v1605
  %v1618 = vmax.f32 %v1602, %v1606
  %v1619 = vmax.f32 %v1603, %v1607
  %v1620 = vmax.f32 %v1616, %v1608
  %v1621 = vmax.f32 %v1617, %v1609
  %v1622 = vmax.f32 %v1618, %v1610
  %v1623 = vmax.f32 %v1619, %v1611
  %v1624 = vmax.f32 %v1620, %v1612
  %v1625 = vmax.f32 %v1621, %v1613
  %v1626 = vmax.f32 %v1622, %v1614
  %v1627 = vmax.f32 %v1623, %v1615
  %v1628 = vmax.f32 %v1624, %v1625
  %v1629 = vmax.f32 %v1626, %v1627
  %v1630 = vmax.f32 %v1628, %v1629
  %v1631 = vrot.slane %v1630, 4
  %v1632 = vmax.f32 %v1630, %v1631
  %v1633 = vrot.slane %v1632, 2
  %v1634 = vmax.f32 %v1632, %v1633
  %v1635 = vrot.slane %v1634, 1
  %v1636 = vmax.f32 %v1634, %v1635
  %v1637 = vpack.c.bf16 %v1636, %v1636
  %1638 = vset.pattern.permute.xlu0 3
  %1639 = vperm.xlu0 %1638, %v972
  %v1640 = vpop.permute.xlu0 %1639
  %v1643 = vunpack.c.l.s4 839922192
  %v1644 = vunpack.c.0.s8 %v1643
  %v1645 = vperm.slane %v1640, %v1644
  %1646 = vset.pattern.permute.xlu0 3
  %1647 = vperm.xlu0 %1646, %v973
  %v1648 = vpop.permute.xlu0 %1647
  %v1651 = vunpack.c.l.s4 839922192
  %v1652 = vunpack.c.0.s8 %v1651
  %v1653 = vperm.slane %v1648, %v1652
  %1654 = vset.pattern.permute.xlu0 3
  %1655 = vperm.xlu0 %1654, %v974
  %v1656 = vpop.permute.xlu0 %1655
  %v1659 = vunpack.c.l.s4 839922192
  %v1660 = vunpack.c.0.s8 %v1659
  %v1661 = vperm.slane %v1656, %v1660
  %1662 = vset.pattern.permute.xlu0 3
  %1663 = vperm.xlu0 %1662, %v975
  %v1664 = vpop.permute.xlu0 %1663
  %v1667 = vunpack.c.l.s4 839922192
  %v1668 = vunpack.c.0.s8 %v1667
  %v1669 = vperm.slane %v1664, %v1668
  %1670 = vset.pattern.permute.xlu0 3
  %1671 = vperm.xlu0 %1670, %v976
  %v1672 = vpop.permute.xlu0 %1671
  %v1675 = vunpack.c.l.s4 839922192
  %v1676 = vunpack.c.0.s8 %v1675
  %v1677 = vperm.slane %v1672, %v1676
  %1678 = vset.pattern.permute.xlu0 3
  %1679 = vperm.xlu0 %1678, %v977
  %v1680 = vpop.permute.xlu0 %1679
  %v1683 = vunpack.c.l.s4 839922192
  %v1684 = vunpack.c.0.s8 %v1683
  %v1685 = vperm.slane %v1680, %v1684
  %1686 = vset.pattern.permute.xlu0 3
  %1687 = vperm.xlu0 %1686, %v978
  %v1688 = vpop.permute.xlu0 %1687
  %v1691 = vunpack.c.l.s4 839922192
  %v1692 = vunpack.c.0.s8 %v1691
  %v1693 = vperm.slane %v1688, %v1692
  %1694 = vset.pattern.permute.xlu0 3
  %1695 = vperm.xlu0 %1694, %v979
  %v1696 = vpop.permute.xlu0 %1695
  %v1699 = vunpack.c.l.s4 839922192
  %v1700 = vunpack.c.0.s8 %v1699
  %v1701 = vperm.slane %v1696, %v1700
  %1702 = vset.pattern.permute.xlu0 3
  %1703 = vperm.xlu0 %1702, %v980
  %v1704 = vpop.permute.xlu0 %1703
  %v1707 = vunpack.c.l.s4 839922192
  %v1708 = vunpack.c.0.s8 %v1707
  %v1709 = vperm.slane %v1704, %v1708
  %1710 = vset.pattern.permute.xlu0 3
  %1711 = vperm.xlu0 %1710, %v981
  %v1712 = vpop.permute.xlu0 %1711
  %v1715 = vunpack.c.l.s4 839922192
  %v1716 = vunpack.c.0.s8 %v1715
  %v1717 = vperm.slane %v1712, %v1716
  %1718 = vset.pattern.permute.xlu0 3
  %1719 = vperm.xlu0 %1718, %v982
  %v1720 = vpop.permute.xlu0 %1719
  %v1723 = vunpack.c.l.s4 839922192
  %v1724 = vunpack.c.0.s8 %v1723
  %v1725 = vperm.slane %v1720, %v1724
  %1726 = vset.pattern.permute.xlu0 3
  %1727 = vperm.xlu0 %1726, %v983
  %v1728 = vpop.permute.xlu0 %1727
  %v1731 = vunpack.c.l.s4 839922192
  %v1732 = vunpack.c.0.s8 %v1731
  %v1733 = vperm.slane %v1728, %v1732
  %1734 = vset.pattern.permute.xlu0 3
  %1735 = vperm.xlu0 %1734, %v984
  %v1736 = vpop.permute.xlu0 %1735
  %v1739 = vunpack.c.l.s4 839922192
  %v1740 = vunpack.c.0.s8 %v1739
  %v1741 = vperm.slane %v1736, %v1740
  %1742 = vset.pattern.permute.xlu0 3
  %1743 = vperm.xlu0 %1742, %v985
  %v1744 = vpop.permute.xlu0 %1743
  %v1747 = vunpack.c.l.s4 839922192
  %v1748 = vunpack.c.0.s8 %v1747
  %v1749 = vperm.slane %v1744, %v1748
  %1750 = vset.pattern.permute.xlu0 3
  %1751 = vperm.xlu0 %1750, %v986
  %v1752 = vpop.permute.xlu0 %1751
  %v1755 = vunpack.c.l.s4 839922192
  %v1756 = vunpack.c.0.s8 %v1755
  %v1757 = vperm.slane %v1752, %v1756
  %1758 = vset.pattern.permute.xlu0 3
  %1759 = vperm.xlu0 %1758, %v987
  %v1760 = vpop.permute.xlu0 %1759
  %v1763 = vunpack.c.l.s4 839922192
  %v1764 = vunpack.c.0.s8 %v1763
  %v1765 = vperm.slane %v1760, %v1764
  %v1766 = vunpack.c.l.bf16 %v1645
  %v1767 = vunpack.c.l.bf16 %v1653
  %v1768 = vunpack.c.l.bf16 %v1661
  %v1769 = vunpack.c.l.bf16 %v1669
  %v1770 = vunpack.c.l.bf16 %v1677
  %v1771 = vunpack.c.l.bf16 %v1685
  %v1772 = vunpack.c.l.bf16 %v1693
  %v1773 = vunpack.c.l.bf16 %v1701
  %v1774 = vunpack.c.l.bf16 %v1709
  %v1775 = vunpack.c.l.bf16 %v1717
  %v1776 = vunpack.c.l.bf16 %v1725
  %v1777 = vunpack.c.l.bf16 %v1733
  %v1778 = vunpack.c.l.bf16 %v1741
  %v1779 = vunpack.c.l.bf16 %v1749
  %v1780 = vunpack.c.l.bf16 %v1757
  %v1781 = vunpack.c.l.bf16 %v1765
  %v1782 = vmul.f32 %v1132, %v1766
  %v1783 = vmul.f32 %v1133, %v1767
  %v1784 = vmul.f32 %v1134, %v1768
  %v1785 = vmul.f32 %v1135, %v1769
  %v1786 = vmul.f32 %v1136, %v1770
  %v1787 = vmul.f32 %v1137, %v1771
  %v1788 = vmul.f32 %v1138, %v1772
  %v1789 = vmul.f32 %v1139, %v1773
  %v1790 = vmul.f32 %v1140, %v1774
  %v1791 = vmul.f32 %v1141, %v1775
  %v1792 = vmul.f32 %v1142, %v1776
  %v1793 = vmul.f32 %v1143, %v1777
  %v1794 = vmul.f32 %v1144, %v1778
  %v1795 = vmul.f32 %v1145, %v1779
  %v1796 = vmul.f32 %v1146, %v1780
  %v1797 = vmul.f32 %v1147, %v1781
  %v1798 = vpack.c.bf16 %v1783, %v1782
  %v1799 = vpack.c.bf16 %v1785, %v1784
  %v1800 = vpack.c.bf16 %v1787, %v1786
  %v1801 = vpack.c.bf16 %v1789, %v1788
  %v1802 = vpack.c.bf16 %v1791, %v1790
  %v1803 = vpack.c.bf16 %v1793, %v1792
  %v1804 = vpack.c.bf16 %v1795, %v1794
  %v1805 = vpack.c.bf16 %v1797, %v1796
  %v1806 = vunpack.c.l.bf16 %v1798
  %v1807 = vunpack.c.h.bf16 %v1798
  %v1808 = vunpack.c.l.bf16 %v1799
  %v1809 = vunpack.c.h.bf16 %v1799
  %v1810 = vunpack.c.l.bf16 %v1800
  %v1811 = vunpack.c.h.bf16 %v1800
  %v1812 = vunpack.c.l.bf16 %v1801
  %v1813 = vunpack.c.h.bf16 %v1801
  %v1814 = vunpack.c.l.bf16 %v1802
  %v1815 = vunpack.c.h.bf16 %v1802
  %v1816 = vunpack.c.l.bf16 %v1803
  %v1817 = vunpack.c.h.bf16 %v1803
  %v1818 = vunpack.c.l.bf16 %v1804
  %v1819 = vunpack.c.h.bf16 %v1804
  %v1820 = vunpack.c.l.bf16 %v1805
  %v1821 = vunpack.c.h.bf16 %v1805
  %v1822 = vmax.f32 %v1806, %v1810
  %v1823 = vmax.f32 %v1807, %v1811
  %v1824 = vmax.f32 %v1808, %v1812
  %v1825 = vmax.f32 %v1809, %v1813
  %v1826 = vmax.f32 %v1822, %v1814
  %v1827 = vmax.f32 %v1823, %v1815
  %v1828 = vmax.f32 %v1824, %v1816
  %v1829 = vmax.f32 %v1825, %v1817
  %v1830 = vmax.f32 %v1826, %v1818
  %v1831 = vmax.f32 %v1827, %v1819
  %v1832 = vmax.f32 %v1828, %v1820
  %v1833 = vmax.f32 %v1829, %v1821
  %v1834 = vmax.f32 %v1830, %v1831
  %v1835 = vmax.f32 %v1832, %v1833
  %v1836 = vmax.f32 %v1834, %v1835
  %v1837 = vrot.slane %v1836, 4
  %v1838 = vmax.f32 %v1836, %v1837
  %v1839 = vrot.slane %v1838, 2
  %v1840 = vmax.f32 %v1838, %v1839
  %v1841 = vrot.slane %v1840, 1
  %v1842 = vmax.f32 %v1840, %v1841
  %v1843 = vpack.c.bf16 %v1842, %v1842
  %1844 = vset.pattern.permute.xlu0 4
  %1845 = vperm.xlu0 %1844, %v972
  %v1846 = vpop.permute.xlu0 %1845
  %v1849 = vunpack.c.l.s4 839922192
  %v1850 = vunpack.c.0.s8 %v1849
  %v1851 = vperm.slane %v1846, %v1850
  %1852 = vset.pattern.permute.xlu0 4
  %1853 = vperm.xlu0 %1852, %v973
  %v1854 = vpop.permute.xlu0 %1853
  %v1857 = vunpack.c.l.s4 839922192
  %v1858 = vunpack.c.0.s8 %v1857
  %v1859 = vperm.slane %v1854, %v1858
  %1860 = vset.pattern.permute.xlu0 4
  %1861 = vperm.xlu0 %1860, %v974
  %v1862 = vpop.permute.xlu0 %1861
  %v1865 = vunpack.c.l.s4 839922192
  %v1866 = vunpack.c.0.s8 %v1865
  %v1867 = vperm.slane %v1862, %v1866
  %1868 = vset.pattern.permute.xlu0 4
  %1869 = vperm.xlu0 %1868, %v975
  %v1870 = vpop.permute.xlu0 %1869
  %v1873 = vunpack.c.l.s4 839922192
  %v1874 = vunpack.c.0.s8 %v1873
  %v1875 = vperm.slane %v1870, %v1874
  %1876 = vset.pattern.permute.xlu0 4
  %1877 = vperm.xlu0 %1876, %v976
  %v1878 = vpop.permute.xlu0 %1877
  %v1881 = vunpack.c.l.s4 839922192
  %v1882 = vunpack.c.0.s8 %v1881
  %v1883 = vperm.slane %v1878, %v1882
  %1884 = vset.pattern.permute.xlu0 4
  %1885 = vperm.xlu0 %1884, %v977
  %v1886 = vpop.permute.xlu0 %1885
  %v1889 = vunpack.c.l.s4 839922192
  %v1890 = vunpack.c.0.s8 %v1889
  %v1891 = vperm.slane %v1886, %v1890
  %1892 = vset.pattern.permute.xlu0 4
  %1893 = vperm.xlu0 %1892, %v978
  %v1894 = vpop.permute.xlu0 %1893
  %v1897 = vunpack.c.l.s4 839922192
  %v1898 = vunpack.c.0.s8 %v1897
  %v1899 = vperm.slane %v1894, %v1898
  %1900 = vset.pattern.permute.xlu0 4
  %1901 = vperm.xlu0 %1900, %v979
  %v1902 = vpop.permute.xlu0 %1901
  %v1905 = vunpack.c.l.s4 839922192
  %v1906 = vunpack.c.0.s8 %v1905
  %v1907 = vperm.slane %v1902, %v1906
  %1908 = vset.pattern.permute.xlu0 4
  %1909 = vperm.xlu0 %1908, %v980
  %v1910 = vpop.permute.xlu0 %1909
  %v1913 = vunpack.c.l.s4 839922192
  %v1914 = vunpack.c.0.s8 %v1913
  %v1915 = vperm.slane %v1910, %v1914
  %1916 = vset.pattern.permute.xlu0 4
  %1917 = vperm.xlu0 %1916, %v981
  %v1918 = vpop.permute.xlu0 %1917
  %v1921 = vunpack.c.l.s4 839922192
  %v1922 = vunpack.c.0.s8 %v1921
  %v1923 = vperm.slane %v1918, %v1922
  %1924 = vset.pattern.permute.xlu0 4
  %1925 = vperm.xlu0 %1924, %v982
  %v1926 = vpop.permute.xlu0 %1925
  %v1929 = vunpack.c.l.s4 839922192
  %v1930 = vunpack.c.0.s8 %v1929
  %v1931 = vperm.slane %v1926, %v1930
  %1932 = vset.pattern.permute.xlu0 4
  %1933 = vperm.xlu0 %1932, %v983
  %v1934 = vpop.permute.xlu0 %1933
  %v1937 = vunpack.c.l.s4 839922192
  %v1938 = vunpack.c.0.s8 %v1937
  %v1939 = vperm.slane %v1934, %v1938
  %1940 = vset.pattern.permute.xlu0 4
  %1941 = vperm.xlu0 %1940, %v984
  %v1942 = vpop.permute.xlu0 %1941
  %v1945 = vunpack.c.l.s4 839922192
  %v1946 = vunpack.c.0.s8 %v1945
  %v1947 = vperm.slane %v1942, %v1946
  %1948 = vset.pattern.permute.xlu0 4
  %1949 = vperm.xlu0 %1948, %v985
  %v1950 = vpop.permute.xlu0 %1949
  %v1953 = vunpack.c.l.s4 839922192
  %v1954 = vunpack.c.0.s8 %v1953
  %v1955 = vperm.slane %v1950, %v1954
  %1956 = vset.pattern.permute.xlu0 4
  %1957 = vperm.xlu0 %1956, %v986
  %v1958 = vpop.permute.xlu0 %1957
  %v1961 = vunpack.c.l.s4 839922192
  %v1962 = vunpack.c.0.s8 %v1961
  %v1963 = vperm.slane %v1958, %v1962
  %1964 = vset.pattern.permute.xlu0 4
  %1965 = vperm.xlu0 %1964, %v987
  %v1966 = vpop.permute.xlu0 %1965
  %v1969 = vunpack.c.l.s4 839922192
  %v1970 = vunpack.c.0.s8 %v1969
  %v1971 = vperm.slane %v1966, %v1970
  %v1972 = vunpack.c.l.bf16 %v1851
  %v1973 = vunpack.c.l.bf16 %v1859
  %v1974 = vunpack.c.l.bf16 %v1867
  %v1975 = vunpack.c.l.bf16 %v1875
  %v1976 = vunpack.c.l.bf16 %v1883
  %v1977 = vunpack.c.l.bf16 %v1891
  %v1978 = vunpack.c.l.bf16 %v1899
  %v1979 = vunpack.c.l.bf16 %v1907
  %v1980 = vunpack.c.l.bf16 %v1915
  %v1981 = vunpack.c.l.bf16 %v1923
  %v1982 = vunpack.c.l.bf16 %v1931
  %v1983 = vunpack.c.l.bf16 %v1939
  %v1984 = vunpack.c.l.bf16 %v1947
  %v1985 = vunpack.c.l.bf16 %v1955
  %v1986 = vunpack.c.l.bf16 %v1963
  %v1987 = vunpack.c.l.bf16 %v1971
  %v1988 = vmul.f32 %v1132, %v1972
  %v1989 = vmul.f32 %v1133, %v1973
  %v1990 = vmul.f32 %v1134, %v1974
  %v1991 = vmul.f32 %v1135, %v1975
  %v1992 = vmul.f32 %v1136, %v1976
  %v1993 = vmul.f32 %v1137, %v1977
  %v1994 = vmul.f32 %v1138, %v1978
  %v1995 = vmul.f32 %v1139, %v1979
  %v1996 = vmul.f32 %v1140, %v1980
  %v1997 = vmul.f32 %v1141, %v1981
  %v1998 = vmul.f32 %v1142, %v1982
  %v1999 = vmul.f32 %v1143, %v1983
  %v2000 = vmul.f32 %v1144, %v1984
  %v2001 = vmul.f32 %v1145, %v1985
  %v2002 = vmul.f32 %v1146, %v1986
  %v2003 = vmul.f32 %v1147, %v1987
  %v2004 = vpack.c.bf16 %v1989, %v1988
  %v2005 = vpack.c.bf16 %v1991, %v1990
  %v2006 = vpack.c.bf16 %v1993, %v1992
  %v2007 = vpack.c.bf16 %v1995, %v1994
  %v2008 = vpack.c.bf16 %v1997, %v1996
  %v2009 = vpack.c.bf16 %v1999, %v1998
  %v2010 = vpack.c.bf16 %v2001, %v2000
  %v2011 = vpack.c.bf16 %v2003, %v2002
  %v2012 = vunpack.c.l.bf16 %v2004
  %v2013 = vunpack.c.h.bf16 %v2004
  %v2014 = vunpack.c.l.bf16 %v2005
  %v2015 = vunpack.c.h.bf16 %v2005
  %v2016 = vunpack.c.l.bf16 %v2006
  %v2017 = vunpack.c.h.bf16 %v2006
  %v2018 = vunpack.c.l.bf16 %v2007
  %v2019 = vunpack.c.h.bf16 %v2007
  %v2020 = vunpack.c.l.bf16 %v2008
  %v2021 = vunpack.c.h.bf16 %v2008
  %v2022 = vunpack.c.l.bf16 %v2009
  %v2023 = vunpack.c.h.bf16 %v2009
  %v2024 = vunpack.c.l.bf16 %v2010
  %v2025 = vunpack.c.h.bf16 %v2010
  %v2026 = vunpack.c.l.bf16 %v2011
  %v2027 = vunpack.c.h.bf16 %v2011
  %v2028 = vmax.f32 %v2012, %v2016
  %v2029 = vmax.f32 %v2013, %v2017
  %v2030 = vmax.f32 %v2014, %v2018
  %v2031 = vmax.f32 %v2015, %v2019
  %v2032 = vmax.f32 %v2028, %v2020
  %v2033 = vmax.f32 %v2029, %v2021
  %v2034 = vmax.f32 %v2030, %v2022
  %v2035 = vmax.f32 %v2031, %v2023
  %v2036 = vmax.f32 %v2032, %v2024
  %v2037 = vmax.f32 %v2033, %v2025
  %v2038 = vmax.f32 %v2034, %v2026
  %v2039 = vmax.f32 %v2035, %v2027
  %v2040 = vmax.f32 %v2036, %v2037
  %v2041 = vmax.f32 %v2038, %v2039
  %v2042 = vmax.f32 %v2040, %v2041
  %v2043 = vrot.slane %v2042, 4
  %v2044 = vmax.f32 %v2042, %v2043
  %v2045 = vrot.slane %v2044, 2
  %v2046 = vmax.f32 %v2044, %v2045
  %v2047 = vrot.slane %v2046, 1
  %v2048 = vmax.f32 %v2046, %v2047
  %v2049 = vpack.c.bf16 %v2048, %v2048
  %2050 = vset.pattern.permute.xlu0 5
  %2051 = vperm.xlu0 %2050, %v972
  %v2052 = vpop.permute.xlu0 %2051
  %v2055 = vunpack.c.l.s4 839922192
  %v2056 = vunpack.c.0.s8 %v2055
  %v2057 = vperm.slane %v2052, %v2056
  %2058 = vset.pattern.permute.xlu0 5
  %2059 = vperm.xlu0 %2058, %v973
  %v2060 = vpop.permute.xlu0 %2059
  %v2063 = vunpack.c.l.s4 839922192
  %v2064 = vunpack.c.0.s8 %v2063
  %v2065 = vperm.slane %v2060, %v2064
  %2066 = vset.pattern.permute.xlu0 5
  %2067 = vperm.xlu0 %2066, %v974
  %v2068 = vpop.permute.xlu0 %2067
  %v2071 = vunpack.c.l.s4 839922192
  %v2072 = vunpack.c.0.s8 %v2071
  %v2073 = vperm.slane %v2068, %v2072
  %2074 = vset.pattern.permute.xlu0 5
  %2075 = vperm.xlu0 %2074, %v975
  %v2076 = vpop.permute.xlu0 %2075
  %v2079 = vunpack.c.l.s4 839922192
  %v2080 = vunpack.c.0.s8 %v2079
  %v2081 = vperm.slane %v2076, %v2080
  %2082 = vset.pattern.permute.xlu0 5
  %2083 = vperm.xlu0 %2082, %v976
  %v2084 = vpop.permute.xlu0 %2083
  %v2087 = vunpack.c.l.s4 839922192
  %v2088 = vunpack.c.0.s8 %v2087
  %v2089 = vperm.slane %v2084, %v2088
  %2090 = vset.pattern.permute.xlu0 5
  %2091 = vperm.xlu0 %2090, %v977
  %v2092 = vpop.permute.xlu0 %2091
  %v2095 = vunpack.c.l.s4 839922192
  %v2096 = vunpack.c.0.s8 %v2095
  %v2097 = vperm.slane %v2092, %v2096
  %2098 = vset.pattern.permute.xlu0 5
  %2099 = vperm.xlu0 %2098, %v978
  %v2100 = vpop.permute.xlu0 %2099
  %v2103 = vunpack.c.l.s4 839922192
  %v2104 = vunpack.c.0.s8 %v2103
  %v2105 = vperm.slane %v2100, %v2104
  %2106 = vset.pattern.permute.xlu0 5
  %2107 = vperm.xlu0 %2106, %v979
  %v2108 = vpop.permute.xlu0 %2107
  %v2111 = vunpack.c.l.s4 839922192
  %v2112 = vunpack.c.0.s8 %v2111
  %v2113 = vperm.slane %v2108, %v2112
  %2114 = vset.pattern.permute.xlu0 5
  %2115 = vperm.xlu0 %2114, %v980
  %v2116 = vpop.permute.xlu0 %2115
  %v2119 = vunpack.c.l.s4 839922192
  %v2120 = vunpack.c.0.s8 %v2119
  %v2121 = vperm.slane %v2116, %v2120
  %2122 = vset.pattern.permute.xlu0 5
  %2123 = vperm.xlu0 %2122, %v981
  %v2124 = vpop.permute.xlu0 %2123
  %v2127 = vunpack.c.l.s4 839922192
  %v2128 = vunpack.c.0.s8 %v2127
  %v2129 = vperm.slane %v2124, %v2128
  %2130 = vset.pattern.permute.xlu0 5
  %2131 = vperm.xlu0 %2130, %v982
  %v2132 = vpop.permute.xlu0 %2131
  %v2135 = vunpack.c.l.s4 839922192
  %v2136 = vunpack.c.0.s8 %v2135
  %v2137 = vperm.slane %v2132, %v2136
  %2138 = vset.pattern.permute.xlu0 5
  %2139 = vperm.xlu0 %2138, %v983
  %v2140 = vpop.permute.xlu0 %2139
  %v2143 = vunpack.c.l.s4 839922192
  %v2144 = vunpack.c.0.s8 %v2143
  %v2145 = vperm.slane %v2140, %v2144
  %2146 = vset.pattern.permute.xlu0 5
  %2147 = vperm.xlu0 %2146, %v984
  %v2148 = vpop.permute.xlu0 %2147
  %v2151 = vunpack.c.l.s4 839922192
  %v2152 = vunpack.c.0.s8 %v2151
  %v2153 = vperm.slane %v2148, %v2152
  %2154 = vset.pattern.permute.xlu0 5
  %2155 = vperm.xlu0 %2154, %v985
  %v2156 = vpop.permute.xlu0 %2155
  %v2159 = vunpack.c.l.s4 839922192
  %v2160 = vunpack.c.0.s8 %v2159
  %v2161 = vperm.slane %v2156, %v2160
  %2162 = vset.pattern.permute.xlu0 5
  %2163 = vperm.xlu0 %2162, %v986
  %v2164 = vpop.permute.xlu0 %2163
  %v2167 = vunpack.c.l.s4 839922192
  %v2168 = vunpack.c.0.s8 %v2167
  %v2169 = vperm.slane %v2164, %v2168
  %2170 = vset.pattern.permute.xlu0 5
  %2171 = vperm.xlu0 %2170, %v987
  %v2172 = vpop.permute.xlu0 %2171
  %v2175 = vunpack.c.l.s4 839922192
  %v2176 = vunpack.c.0.s8 %v2175
  %v2177 = vperm.slane %v2172, %v2176
  %v2178 = vunpack.c.l.bf16 %v2057
  %v2179 = vunpack.c.l.bf16 %v2065
  %v2180 = vunpack.c.l.bf16 %v2073
  %v2181 = vunpack.c.l.bf16 %v2081
  %v2182 = vunpack.c.l.bf16 %v2089
  %v2183 = vunpack.c.l.bf16 %v2097
  %v2184 = vunpack.c.l.bf16 %v2105
  %v2185 = vunpack.c.l.bf16 %v2113
  %v2186 = vunpack.c.l.bf16 %v2121
  %v2187 = vunpack.c.l.bf16 %v2129
  %v2188 = vunpack.c.l.bf16 %v2137
  %v2189 = vunpack.c.l.bf16 %v2145
  %v2190 = vunpack.c.l.bf16 %v2153
  %v2191 = vunpack.c.l.bf16 %v2161
  %v2192 = vunpack.c.l.bf16 %v2169
  %v2193 = vunpack.c.l.bf16 %v2177
  %v2194 = vmul.f32 %v1132, %v2178
  %v2195 = vmul.f32 %v1133, %v2179
  %v2196 = vmul.f32 %v1134, %v2180
  %v2197 = vmul.f32 %v1135, %v2181
  %v2198 = vmul.f32 %v1136, %v2182
  %v2199 = vmul.f32 %v1137, %v2183
  %v2200 = vmul.f32 %v1138, %v2184
  %v2201 = vmul.f32 %v1139, %v2185
  %v2202 = vmul.f32 %v1140, %v2186
  %v2203 = vmul.f32 %v1141, %v2187
  %v2204 = vmul.f32 %v1142, %v2188
  %v2205 = vmul.f32 %v1143, %v2189
  %v2206 = vmul.f32 %v1144, %v2190
  %v2207 = vmul.f32 %v1145, %v2191
  %v2208 = vmul.f32 %v1146, %v2192
  %v2209 = vmul.f32 %v1147, %v2193
  %v2210 = vpack.c.bf16 %v2195, %v2194
  %v2211 = vpack.c.bf16 %v2197, %v2196
  %v2212 = vpack.c.bf16 %v2199, %v2198
  %v2213 = vpack.c.bf16 %v2201, %v2200
  %v2214 = vpack.c.bf16 %v2203, %v2202
  %v2215 = vpack.c.bf16 %v2205, %v2204
  %v2216 = vpack.c.bf16 %v2207, %v2206
  %v2217 = vpack.c.bf16 %v2209, %v2208
  %v2218 = vunpack.c.l.bf16 %v2210
  %v2219 = vunpack.c.h.bf16 %v2210
  %v2220 = vunpack.c.l.bf16 %v2211
  %v2221 = vunpack.c.h.bf16 %v2211
  %v2222 = vunpack.c.l.bf16 %v2212
  %v2223 = vunpack.c.h.bf16 %v2212
  %v2224 = vunpack.c.l.bf16 %v2213
  %v2225 = vunpack.c.h.bf16 %v2213
  %v2226 = vunpack.c.l.bf16 %v2214
  %v2227 = vunpack.c.h.bf16 %v2214
  %v2228 = vunpack.c.l.bf16 %v2215
  %v2229 = vunpack.c.h.bf16 %v2215
  %v2230 = vunpack.c.l.bf16 %v2216
  %v2231 = vunpack.c.h.bf16 %v2216
  %v2232 = vunpack.c.l.bf16 %v2217
  %v2233 = vunpack.c.h.bf16 %v2217
  %v2234 = vmax.f32 %v2218, %v2222
  %v2235 = vmax.f32 %v2219, %v2223
  %v2236 = vmax.f32 %v2220, %v2224
  %v2237 = vmax.f32 %v2221, %v2225
  %v2238 = vmax.f32 %v2234, %v2226
  %v2239 = vmax.f32 %v2235, %v2227
  %v2240 = vmax.f32 %v2236, %v2228
  %v2241 = vmax.f32 %v2237, %v2229
  %v2242 = vmax.f32 %v2238, %v2230
  %v2243 = vmax.f32 %v2239, %v2231
  %v2244 = vmax.f32 %v2240, %v2232
  %v2245 = vmax.f32 %v2241, %v2233
  %v2246 = vmax.f32 %v2242, %v2243
  %v2247 = vmax.f32 %v2244, %v2245
  %v2248 = vmax.f32 %v2246, %v2247
  %v2249 = vrot.slane %v2248, 4
  %v2250 = vmax.f32 %v2248, %v2249
  %v2251 = vrot.slane %v2250, 2
  %v2252 = vmax.f32 %v2250, %v2251
  %v2253 = vrot.slane %v2252, 1
  %v2254 = vmax.f32 %v2252, %v2253
  %v2255 = vpack.c.bf16 %v2254, %v2254
  %2256 = vset.pattern.permute.xlu0 6
  %2257 = vperm.xlu0 %2256, %v972
  %v2258 = vpop.permute.xlu0 %2257
  %v2261 = vunpack.c.l.s4 839922192
  %v2262 = vunpack.c.0.s8 %v2261
  %v2263 = vperm.slane %v2258, %v2262
  %2264 = vset.pattern.permute.xlu0 6
  %2265 = vperm.xlu0 %2264, %v973
  %v2266 = vpop.permute.xlu0 %2265
  %v2269 = vunpack.c.l.s4 839922192
  %v2270 = vunpack.c.0.s8 %v2269
  %v2271 = vperm.slane %v2266, %v2270
  %2272 = vset.pattern.permute.xlu0 6
  %2273 = vperm.xlu0 %2272, %v974
  %v2274 = vpop.permute.xlu0 %2273
  %v2277 = vunpack.c.l.s4 839922192
  %v2278 = vunpack.c.0.s8 %v2277
  %v2279 = vperm.slane %v2274, %v2278
  %2280 = vset.pattern.permute.xlu0 6
  %2281 = vperm.xlu0 %2280, %v975
  %v2282 = vpop.permute.xlu0 %2281
  %v2285 = vunpack.c.l.s4 839922192
  %v2286 = vunpack.c.0.s8 %v2285
  %v2287 = vperm.slane %v2282, %v2286
  %2288 = vset.pattern.permute.xlu0 6
  %2289 = vperm.xlu0 %2288, %v976
  %v2290 = vpop.permute.xlu0 %2289
  %v2293 = vunpack.c.l.s4 839922192
  %v2294 = vunpack.c.0.s8 %v2293
  %v2295 = vperm.slane %v2290, %v2294
  %2296 = vset.pattern.permute.xlu0 6
  %2297 = vperm.xlu0 %2296, %v977
  %v2298 = vpop.permute.xlu0 %2297
  %v2301 = vunpack.c.l.s4 839922192
  %v2302 = vunpack.c.0.s8 %v2301
  %v2303 = vperm.slane %v2298, %v2302
  %2304 = vset.pattern.permute.xlu0 6
  %2305 = vperm.xlu0 %2304, %v978
  %v2306 = vpop.permute.xlu0 %2305
  %v2309 = vunpack.c.l.s4 839922192
  %v2310 = vunpack.c.0.s8 %v2309
  %v2311 = vperm.slane %v2306, %v2310
  %2312 = vset.pattern.permute.xlu0 6
  %2313 = vperm.xlu0 %2312, %v979
  %v2314 = vpop.permute.xlu0 %2313
  %v2317 = vunpack.c.l.s4 839922192
  %v2318 = vunpack.c.0.s8 %v2317
  %v2319 = vperm.slane %v2314, %v2318
  %2320 = vset.pattern.permute.xlu0 6
  %2321 = vperm.xlu0 %2320, %v980
  %v2322 = vpop.permute.xlu0 %2321
  %v2325 = vunpack.c.l.s4 839922192
  %v2326 = vunpack.c.0.s8 %v2325
  %v2327 = vperm.slane %v2322, %v2326
  %2328 = vset.pattern.permute.xlu0 6
  %2329 = vperm.xlu0 %2328, %v981
  %v2330 = vpop.permute.xlu0 %2329
  %v2333 = vunpack.c.l.s4 839922192
  %v2334 = vunpack.c.0.s8 %v2333
  %v2335 = vperm.slane %v2330, %v2334
  %2336 = vset.pattern.permute.xlu0 6
  %2337 = vperm.xlu0 %2336, %v982
  %v2338 = vpop.permute.xlu0 %2337
  %v2341 = vunpack.c.l.s4 839922192
  %v2342 = vunpack.c.0.s8 %v2341
  %v2343 = vperm.slane %v2338, %v2342
  %2344 = vset.pattern.permute.xlu0 6
  %2345 = vperm.xlu0 %2344, %v983
  %v2346 = vpop.permute.xlu0 %2345
  %v2349 = vunpack.c.l.s4 839922192
  %v2350 = vunpack.c.0.s8 %v2349
  %v2351 = vperm.slane %v2346, %v2350
  %2352 = vset.pattern.permute.xlu0 6
  %2353 = vperm.xlu0 %2352, %v984
  %v2354 = vpop.permute.xlu0 %2353
  %v2357 = vunpack.c.l.s4 839922192
  %v2358 = vunpack.c.0.s8 %v2357
  %v2359 = vperm.slane %v2354, %v2358
  %2360 = vset.pattern.permute.xlu0 6
  %2361 = vperm.xlu0 %2360, %v985
  %v2362 = vpop.permute.xlu0 %2361
  %v2365 = vunpack.c.l.s4 839922192
  %v2366 = vunpack.c.0.s8 %v2365
  %v2367 = vperm.slane %v2362, %v2366
  %2368 = vset.pattern.permute.xlu0 6
  %2369 = vperm.xlu0 %2368, %v986
  %v2370 = vpop.permute.xlu0 %2369
  %v2373 = vunpack.c.l.s4 839922192
  %v2374 = vunpack.c.0.s8 %v2373
  %v2375 = vperm.slane %v2370, %v2374
  %2376 = vset.pattern.permute.xlu0 6
  %2377 = vperm.xlu0 %2376, %v987
  %v2378 = vpop.permute.xlu0 %2377
  %v2381 = vunpack.c.l.s4 839922192
  %v2382 = vunpack.c.0.s8 %v2381
  %v2383 = vperm.slane %v2378, %v2382
  %v2384 = vunpack.c.l.bf16 %v2263
  %v2385 = vunpack.c.l.bf16 %v2271
  %v2386 = vunpack.c.l.bf16 %v2279
  %v2387 = vunpack.c.l.bf16 %v2287
  %v2388 = vunpack.c.l.bf16 %v2295
  %v2389 = vunpack.c.l.bf16 %v2303
  %v2390 = vunpack.c.l.bf16 %v2311
  %v2391 = vunpack.c.l.bf16 %v2319
  %v2392 = vunpack.c.l.bf16 %v2327
  %v2393 = vunpack.c.l.bf16 %v2335
  %v2394 = vunpack.c.l.bf16 %v2343
  %v2395 = vunpack.c.l.bf16 %v2351
  %v2396 = vunpack.c.l.bf16 %v2359
  %v2397 = vunpack.c.l.bf16 %v2367
  %v2398 = vunpack.c.l.bf16 %v2375
  %v2399 = vunpack.c.l.bf16 %v2383
  %v2400 = vmul.f32 %v1132, %v2384
  %v2401 = vmul.f32 %v1133, %v2385
  %v2402 = vmul.f32 %v1134, %v2386
  %v2403 = vmul.f32 %v1135, %v2387
  %v2404 = vmul.f32 %v1136, %v2388
  %v2405 = vmul.f32 %v1137, %v2389
  %v2406 = vmul.f32 %v1138, %v2390
  %v2407 = vmul.f32 %v1139, %v2391
  %v2408 = vmul.f32 %v1140, %v2392
  %v2409 = vmul.f32 %v1141, %v2393
  %v2410 = vmul.f32 %v1142, %v2394
  %v2411 = vmul.f32 %v1143, %v2395
  %v2412 = vmul.f32 %v1144, %v2396
  %v2413 = vmul.f32 %v1145, %v2397
  %v2414 = vmul.f32 %v1146, %v2398
  %v2415 = vmul.f32 %v1147, %v2399
  %v2416 = vpack.c.bf16 %v2401, %v2400
  %v2417 = vpack.c.bf16 %v2403, %v2402
  %v2418 = vpack.c.bf16 %v2405, %v2404
  %v2419 = vpack.c.bf16 %v2407, %v2406
  %v2420 = vpack.c.bf16 %v2409, %v2408
  %v2421 = vpack.c.bf16 %v2411, %v2410
  %v2422 = vpack.c.bf16 %v2413, %v2412
  %v2423 = vpack.c.bf16 %v2415, %v2414
  %v2424 = vunpack.c.l.bf16 %v2416
  %v2425 = vunpack.c.h.bf16 %v2416
  %v2426 = vunpack.c.l.bf16 %v2417
  %v2427 = vunpack.c.h.bf16 %v2417
  %v2428 = vunpack.c.l.bf16 %v2418
  %v2429 = vunpack.c.h.bf16 %v2418
  %v2430 = vunpack.c.l.bf16 %v2419
  %v2431 = vunpack.c.h.bf16 %v2419
  %v2432 = vunpack.c.l.bf16 %v2420
  %v2433 = vunpack.c.h.bf16 %v2420
  %v2434 = vunpack.c.l.bf16 %v2421
  %v2435 = vunpack.c.h.bf16 %v2421
  %v2436 = vunpack.c.l.bf16 %v2422
  %v2437 = vunpack.c.h.bf16 %v2422
  %v2438 = vunpack.c.l.bf16 %v2423
  %v2439 = vunpack.c.h.bf16 %v2423
  %v2440 = vmax.f32 %v2424, %v2428
  %v2441 = vmax.f32 %v2425, %v2429
  %v2442 = vmax.f32 %v2426, %v2430
  %v2443 = vmax.f32 %v2427, %v2431
  %v2444 = vmax.f32 %v2440, %v2432
  %v2445 = vmax.f32 %v2441, %v2433
  %v2446 = vmax.f32 %v2442, %v2434
  %v2447 = vmax.f32 %v2443, %v2435
  %v2448 = vmax.f32 %v2444, %v2436
  %v2449 = vmax.f32 %v2445, %v2437
  %v2450 = vmax.f32 %v2446, %v2438
  %v2451 = vmax.f32 %v2447, %v2439
  %v2452 = vmax.f32 %v2448, %v2449
  %v2453 = vmax.f32 %v2450, %v2451
  %v2454 = vmax.f32 %v2452, %v2453
  %v2455 = vrot.slane %v2454, 4
  %v2456 = vmax.f32 %v2454, %v2455
  %v2457 = vrot.slane %v2456, 2
  %v2458 = vmax.f32 %v2456, %v2457
  %v2459 = vrot.slane %v2458, 1
  %v2460 = vmax.f32 %v2458, %v2459
  %v2461 = vpack.c.bf16 %v2460, %v2460
  %2462 = vset.pattern.permute.xlu0 7
  %2463 = vperm.xlu0 %2462, %v972
  %v2464 = vpop.permute.xlu0 %2463
  %v2467 = vunpack.c.l.s4 839922192
  %v2468 = vunpack.c.0.s8 %v2467
  %v2469 = vperm.slane %v2464, %v2468
  %2470 = vset.pattern.permute.xlu0 7
  %2471 = vperm.xlu0 %2470, %v973
  %v2472 = vpop.permute.xlu0 %2471
  %v2475 = vunpack.c.l.s4 839922192
  %v2476 = vunpack.c.0.s8 %v2475
  %v2477 = vperm.slane %v2472, %v2476
  %2478 = vset.pattern.permute.xlu0 7
  %2479 = vperm.xlu0 %2478, %v974
  %v2480 = vpop.permute.xlu0 %2479
  %v2483 = vunpack.c.l.s4 839922192
  %v2484 = vunpack.c.0.s8 %v2483
  %v2485 = vperm.slane %v2480, %v2484
  %2486 = vset.pattern.permute.xlu0 7
  %2487 = vperm.xlu0 %2486, %v975
  %v2488 = vpop.permute.xlu0 %2487
  %v2491 = vunpack.c.l.s4 839922192
  %v2492 = vunpack.c.0.s8 %v2491
  %v2493 = vperm.slane %v2488, %v2492
  %2494 = vset.pattern.permute.xlu0 7
  %2495 = vperm.xlu0 %2494, %v976
  %v2496 = vpop.permute.xlu0 %2495
  %v2499 = vunpack.c.l.s4 839922192
  %v2500 = vunpack.c.0.s8 %v2499
  %v2501 = vperm.slane %v2496, %v2500
  %2502 = vset.pattern.permute.xlu0 7
  %2503 = vperm.xlu0 %2502, %v977
  %v2504 = vpop.permute.xlu0 %2503
  %v2507 = vunpack.c.l.s4 839922192
  %v2508 = vunpack.c.0.s8 %v2507
  %v2509 = vperm.slane %v2504, %v2508
  %2510 = vset.pattern.permute.xlu0 7
  %2511 = vperm.xlu0 %2510, %v978
  %v2512 = vpop.permute.xlu0 %2511
  %v2515 = vunpack.c.l.s4 839922192
  %v2516 = vunpack.c.0.s8 %v2515
  %v2517 = vperm.slane %v2512, %v2516
  %2518 = vset.pattern.permute.xlu0 7
  %2519 = vperm.xlu0 %2518, %v979
  %v2520 = vpop.permute.xlu0 %2519
  %v2523 = vunpack.c.l.s4 839922192
  %v2524 = vunpack.c.0.s8 %v2523
  %v2525 = vperm.slane %v2520, %v2524
  %2526 = vset.pattern.permute.xlu0 7
  %2527 = vperm.xlu0 %2526, %v980
  %v2528 = vpop.permute.xlu0 %2527
  %v2531 = vunpack.c.l.s4 839922192
  %v2532 = vunpack.c.0.s8 %v2531
  %v2533 = vperm.slane %v2528, %v2532
  %2534 = vset.pattern.permute.xlu0 7
  %2535 = vperm.xlu0 %2534, %v981
  %v2536 = vpop.permute.xlu0 %2535
  %v2539 = vunpack.c.l.s4 839922192
  %v2540 = vunpack.c.0.s8 %v2539
  %v2541 = vperm.slane %v2536, %v2540
  %2542 = vset.pattern.permute.xlu0 7
  %2543 = vperm.xlu0 %2542, %v982
  %v2544 = vpop.permute.xlu0 %2543
  %v2547 = vunpack.c.l.s4 839922192
  %v2548 = vunpack.c.0.s8 %v2547
  %v2549 = vperm.slane %v2544, %v2548
  %2550 = vset.pattern.permute.xlu0 7
  %2551 = vperm.xlu0 %2550, %v983
  %v2552 = vpop.permute.xlu0 %2551
  %v2555 = vunpack.c.l.s4 839922192
  %v2556 = vunpack.c.0.s8 %v2555
  %v2557 = vperm.slane %v2552, %v2556
  %2558 = vset.pattern.permute.xlu0 7
  %2559 = vperm.xlu0 %2558, %v984
  %v2560 = vpop.permute.xlu0 %2559
  %v2563 = vunpack.c.l.s4 839922192
  %v2564 = vunpack.c.0.s8 %v2563
  %v2565 = vperm.slane %v2560, %v2564
  %2566 = vset.pattern.permute.xlu0 7
  %2567 = vperm.xlu0 %2566, %v985
  %v2568 = vpop.permute.xlu0 %2567
  %v2571 = vunpack.c.l.s4 839922192
  %v2572 = vunpack.c.0.s8 %v2571
  %v2573 = vperm.slane %v2568, %v2572
  %2574 = vset.pattern.permute.xlu0 7
  %2575 = vperm.xlu0 %2574, %v986
  %v2576 = vpop.permute.xlu0 %2575
  %v2579 = vunpack.c.l.s4 839922192
  %v2580 = vunpack.c.0.s8 %v2579
  %v2581 = vperm.slane %v2576, %v2580
  %2582 = vset.pattern.permute.xlu0 7
  %2583 = vperm.xlu0 %2582, %v987
  %v2584 = vpop.permute.xlu0 %2583
  %v2587 = vunpack.c.l.s4 839922192
  %v2588 = vunpack.c.0.s8 %v2587
  %v2589 = vperm.slane %v2584, %v2588
  %v2590 = vunpack.c.l.bf16 %v2469
  %v2591 = vunpack.c.l.bf16 %v2477
  %v2592 = vunpack.c.l.bf16 %v2485
  %v2593 = vunpack.c.l.bf16 %v2493
  %v2594 = vunpack.c.l.bf16 %v2501
  %v2595 = vunpack.c.l.bf16 %v2509
  %v2596 = vunpack.c.l.bf16 %v2517
  %v2597 = vunpack.c.l.bf16 %v2525
  %v2598 = vunpack.c.l.bf16 %v2533
  %v2599 = vunpack.c.l.bf16 %v2541
  %v2600 = vunpack.c.l.bf16 %v2549
  %v2601 = vunpack.c.l.bf16 %v2557
  %v2602 = vunpack.c.l.bf16 %v2565
  %v2603 = vunpack.c.l.bf16 %v2573
  %v2604 = vunpack.c.l.bf16 %v2581
  %v2605 = vunpack.c.l.bf16 %v2589
  %v2606 = vmul.f32 %v1132, %v2590
  %v2607 = vmul.f32 %v1133, %v2591
  %v2608 = vmul.f32 %v1134, %v2592
  %v2609 = vmul.f32 %v1135, %v2593
  %v2610 = vmul.f32 %v1136, %v2594
  %v2611 = vmul.f32 %v1137, %v2595
  %v2612 = vmul.f32 %v1138, %v2596
  %v2613 = vmul.f32 %v1139, %v2597
  %v2614 = vmul.f32 %v1140, %v2598
  %v2615 = vmul.f32 %v1141, %v2599
  %v2616 = vmul.f32 %v1142, %v2600
  %v2617 = vmul.f32 %v1143, %v2601
  %v2618 = vmul.f32 %v1144, %v2602
  %v2619 = vmul.f32 %v1145, %v2603
  %v2620 = vmul.f32 %v1146, %v2604
  %v2621 = vmul.f32 %v1147, %v2605
  %v2622 = vpack.c.bf16 %v2607, %v2606
  %v2623 = vpack.c.bf16 %v2609, %v2608
  %v2624 = vpack.c.bf16 %v2611, %v2610
  %v2625 = vpack.c.bf16 %v2613, %v2612
  %v2626 = vpack.c.bf16 %v2615, %v2614
  %v2627 = vpack.c.bf16 %v2617, %v2616
  %v2628 = vpack.c.bf16 %v2619, %v2618
  %v2629 = vpack.c.bf16 %v2621, %v2620
  %v2630 = vunpack.c.l.bf16 %v2622
  %v2631 = vunpack.c.h.bf16 %v2622
  %v2632 = vunpack.c.l.bf16 %v2623
  %v2633 = vunpack.c.h.bf16 %v2623
  %v2634 = vunpack.c.l.bf16 %v2624
  %v2635 = vunpack.c.h.bf16 %v2624
  %v2636 = vunpack.c.l.bf16 %v2625
  %v2637 = vunpack.c.h.bf16 %v2625
  %v2638 = vunpack.c.l.bf16 %v2626
  %v2639 = vunpack.c.h.bf16 %v2626
  %v2640 = vunpack.c.l.bf16 %v2627
  %v2641 = vunpack.c.h.bf16 %v2627
  %v2642 = vunpack.c.l.bf16 %v2628
  %v2643 = vunpack.c.h.bf16 %v2628
  %v2644 = vunpack.c.l.bf16 %v2629
  %v2645 = vunpack.c.h.bf16 %v2629
  %v2646 = vmax.f32 %v2630, %v2634
  %v2647 = vmax.f32 %v2631, %v2635
  %v2648 = vmax.f32 %v2632, %v2636
  %v2649 = vmax.f32 %v2633, %v2637
  %v2650 = vmax.f32 %v2646, %v2638
  %v2651 = vmax.f32 %v2647, %v2639
  %v2652 = vmax.f32 %v2648, %v2640
  %v2653 = vmax.f32 %v2649, %v2641
  %v2654 = vmax.f32 %v2650, %v2642
  %v2655 = vmax.f32 %v2651, %v2643
  %v2656 = vmax.f32 %v2652, %v2644
  %v2657 = vmax.f32 %v2653, %v2645
  %v2658 = vmax.f32 %v2654, %v2655
  %v2659 = vmax.f32 %v2656, %v2657
  %v2660 = vmax.f32 %v2658, %v2659
  %v2661 = vrot.slane %v2660, 4
  %v2662 = vmax.f32 %v2660, %v2661
  %v2663 = vrot.slane %v2662, 2
  %v2664 = vmax.f32 %v2662, %v2663
  %v2665 = vrot.slane %v2664, 1
  %v2666 = vmax.f32 %v2664, %v2665
  %v2667 = vpack.c.bf16 %v2666, %v2666
  %vm2668 = vcmask 1040384
  %vm2669 = vsmask.f32 256
  %vm2670 = vmand %vm2668, %vm2669
  %v2671 = vsel %vm2670, %v1225, %v1431
  %vm2672 = vcmask 1040384
  %v2675 = vsel %vm2672, %v2671, %v1637
  %vm2677 = vcmask 1041408
  %vm2678 = vsmask.f32 1280
  %vm2679 = vmand %vm2677, %vm2678
  %v2680 = vsel %vm2679, %v2675, %v1843
  %vm2681 = vcmask 1041408
  %v2684 = vsel %vm2681, %v2680, %v2049
  %vm2686 = vcmask 1042432
  %vm2687 = vsmask.f32 2304
  %vm2688 = vmand %vm2686, %vm2687
  %v2689 = vsel %vm2688, %v2684, %v2255
  %vm2690 = vcmask 1042432
  %v2693 = vsel %vm2690, %v2689, %v2461
  %vm2695 = vcmask 1043456
  %vm2696 = vsmask.f32 3328
  %vm2697 = vmand %vm2695, %vm2696
  %v2698 = vsel %vm2697, %v2693, %v2667
  %v2699 = vld [vmem:[%s5] sm:$0xf]
  %v2700 = vld [vmem:[%s5 + $0x4] sm:$0xf]
  %v2701 = vld [vmem:[%s5 + $0x8] sm:$0xf]
  %v2702 = vld [vmem:[%s5 + $0xc] sm:$0xf]
  %v2703 = vld [vmem:[%s5 + $0x10] sm:$0xf]
  %v2704 = vld [vmem:[%s5 + $0x14] sm:$0xf]
  %v2705 = vld [vmem:[%s5 + $0x18] sm:$0xf]
  %v2706 = vld [vmem:[%s5 + $0x1c] sm:$0xf]
  %v2707 = vld [vmem:[%s5 + $0x20] sm:$0xf]
  %v2708 = vld [vmem:[%s5 + $0x24] sm:$0xf]
  %v2709 = vld [vmem:[%s5 + $0x28] sm:$0xf]
  %v2710 = vld [vmem:[%s5 + $0x2c] sm:$0xf]
  %v2711 = vld [vmem:[%s5 + $0x30] sm:$0xf]
  %v2712 = vld [vmem:[%s5 + $0x34] sm:$0xf]
  %v2713 = vld [vmem:[%s5 + $0x38] sm:$0xf]
  %v2714 = vld [vmem:[%s5 + $0x3c] sm:$0xf]
  %v2715 = vld [vmem:[%s6] sm:$0x1]
  %v2716 = vld [vmem:[%s7] sm:$0xf]
  %v2717 = vld [vmem:[%s7 + $0x4] sm:$0xf]
  %v2718 = vld [vmem:[%s7 + $0x8] sm:$0xf]
  %v2719 = vld [vmem:[%s7 + $0xc] sm:$0xf]
  %v2720 = vld [vmem:[%s7 + $0x10] sm:$0xf]
  %v2721 = vld [vmem:[%s7 + $0x14] sm:$0xf]
  %v2722 = vld [vmem:[%s7 + $0x18] sm:$0xf]
  %v2723 = vld [vmem:[%s7 + $0x1c] sm:$0xf]
  %v2724 = vld [vmem:[%s7 + $0x20] sm:$0xf]
  %v2725 = vld [vmem:[%s7 + $0x24] sm:$0xf]
  %v2726 = vld [vmem:[%s7 + $0x28] sm:$0xf]
  %v2727 = vld [vmem:[%s7 + $0x2c] sm:$0xf]
  %v2728 = vld [vmem:[%s7 + $0x30] sm:$0xf]
  %v2729 = vld [vmem:[%s7 + $0x34] sm:$0xf]
  %v2730 = vld [vmem:[%s7 + $0x38] sm:$0xf]
  %v2731 = vld [vmem:[%s7 + $0x3c] sm:$0xf]
  %v2732 = vld [vmem:[%s8] sm:$0x1]
  %v2733 = vld [vmem:[%s9] sm:$0xf]
  %v2734 = vld [vmem:[%s9 + $0x4] sm:$0xf]
  %v2735 = vld [vmem:[%s9 + $0x8] sm:$0xf]
  %v2736 = vld [vmem:[%s9 + $0xc] sm:$0xf]
  %v2737 = vld [vmem:[%s9 + $0x10] sm:$0xf]
  %v2738 = vld [vmem:[%s9 + $0x14] sm:$0xf]
  %v2739 = vld [vmem:[%s9 + $0x18] sm:$0xf]
  %v2740 = vld [vmem:[%s9 + $0x1c] sm:$0xf]
  %v2741 = vld [vmem:[%s9 + $0x20] sm:$0xf]
  %v2742 = vld [vmem:[%s9 + $0x24] sm:$0xf]
  %v2743 = vld [vmem:[%s9 + $0x28] sm:$0xf]
  %v2744 = vld [vmem:[%s9 + $0x2c] sm:$0xf]
  %v2745 = vld [vmem:[%s9 + $0x30] sm:$0xf]
  %v2746 = vld [vmem:[%s9 + $0x34] sm:$0xf]
  %v2747 = vld [vmem:[%s9 + $0x38] sm:$0xf]
  %v2748 = vld [vmem:[%s9 + $0x3c] sm:$0xf]
  %v2749 = vld [vmem:[%s10] sm:$0x1]
  %v2751 = vperm.slane %v2715, 0
  %v2769 = vunpack.c.l.b16 %v2699
  %v2770 = vunpack.c.l.b16 %v2700
  %v2771 = vunpack.c.l.b16 %v2701
  %v2772 = vunpack.c.l.b16 %v2702
  %v2773 = vunpack.c.l.b16 %v2703
  %v2774 = vunpack.c.l.b16 %v2704
  %v2775 = vunpack.c.l.b16 %v2705
  %v2776 = vunpack.c.l.b16 %v2706
  %v2777 = vunpack.c.l.b16 %v2707
  %v2778 = vunpack.c.l.b16 %v2708
  %v2779 = vunpack.c.l.b16 %v2709
  %v2780 = vunpack.c.l.b16 %v2710
  %v2781 = vunpack.c.l.b16 %v2711
  %v2782 = vunpack.c.l.b16 %v2712
  %v2783 = vunpack.c.l.b16 %v2713
  %v2784 = vunpack.c.l.b16 %v2714
  %v2785 = vpack.c.b16 %v2770, %v2769
  %v2786 = vpack.c.b16 %v2772, %v2771
  %v2787 = vpack.c.b16 %v2774, %v2773
  %v2788 = vpack.c.b16 %v2776, %v2775
  %v2789 = vpack.c.b16 %v2778, %v2777
  %v2790 = vpack.c.b16 %v2780, %v2779
  %v2791 = vpack.c.b16 %v2782, %v2781
  %v2792 = vpack.c.b16 %v2784, %v2783
  %2801 = vmatpush.bf16.msra.mxu0 %v2792
  %2802 = vmatpush.bf16.msra.mxu0 %v2791
  %2803 = vmatpush.bf16.msra.mxu0 %v2790
  %2804 = vmatpush.bf16.msra.mxu0 %v2789
  %2805 = vmatpush.bf16.msra.mxu0 %v2788
  %2806 = vmatpush.bf16.msra.mxu0 %v2787
  %2807 = vmatpush.bf16.msra.mxu0 %v2786
  %2808 = vmatpush.bf16.msra.mxu0 %v2785
  %2809 = vmatmul.bf16.gmra.mxu0 %v2698
  %v2810 = vpop.f32.mrf.mxu0
  %v2811 = vadd.f32 %v2751, %v2810
  %v2812 = vpop.f32.mrf.mxu0
  %2813 = vdwg.mxu0
  %v2814 = vpack.c.bf16 %v2811, %v2811
  %v2816 = vperm.slane %v2732, 0
  %v2834 = vunpack.c.l.b16 %v2716
  %v2835 = vunpack.c.l.b16 %v2717
  %v2836 = vunpack.c.l.b16 %v2718
  %v2837 = vunpack.c.l.b16 %v2719
  %v2838 = vunpack.c.l.b16 %v2720
  %v2839 = vunpack.c.l.b16 %v2721
  %v2840 = vunpack.c.l.b16 %v2722
  %v2841 = vunpack.c.l.b16 %v2723
  %v2842 = vunpack.c.l.b16 %v2724
  %v2843 = vunpack.c.l.b16 %v2725
  %v2844 = vunpack.c.l.b16 %v2726
  %v2845 = vunpack.c.l.b16 %v2727
  %v2846 = vunpack.c.l.b16 %v2728
  %v2847 = vunpack.c.l.b16 %v2729
  %v2848 = vunpack.c.l.b16 %v2730
  %v2849 = vunpack.c.l.b16 %v2731
  %v2850 = vpack.c.b16 %v2835, %v2834
  %v2851 = vpack.c.b16 %v2837, %v2836
  %v2852 = vpack.c.b16 %v2839, %v2838
  %v2853 = vpack.c.b16 %v2841, %v2840
  %v2854 = vpack.c.b16 %v2843, %v2842
  %v2855 = vpack.c.b16 %v2845, %v2844
  %v2856 = vpack.c.b16 %v2847, %v2846
  %v2857 = vpack.c.b16 %v2849, %v2848
  %2866 = vmatpush.bf16.msra.mxu0 %v2857
  %2867 = vmatpush.bf16.msra.mxu0 %v2856
  %2868 = vmatpush.bf16.msra.mxu0 %v2855
  %2869 = vmatpush.bf16.msra.mxu0 %v2854
  %2870 = vmatpush.bf16.msra.mxu0 %v2853
  %2871 = vmatpush.bf16.msra.mxu0 %v2852
  %2872 = vmatpush.bf16.msra.mxu0 %v2851
  %2873 = vmatpush.bf16.msra.mxu0 %v2850
  %2874 = vmatmul.bf16.gmra.mxu0 %v2814
  %v2875 = vpop.f32.mrf.mxu0
  %v2876 = vadd.f32 %v2816, %v2875
  %v2877 = vpop.f32.mrf.mxu0
  %2878 = vdwg.mxu0
  %v2879 = vpack.c.bf16 %v2876, %v2876
  %v2881 = vperm.slane %v2749, 0
  %v2899 = vunpack.c.l.b16 %v2733
  %v2900 = vunpack.c.l.b16 %v2734
  %v2901 = vunpack.c.l.b16 %v2735
  %v2902 = vunpack.c.l.b16 %v2736
  %v2903 = vunpack.c.l.b16 %v2737
  %v2904 = vunpack.c.l.b16 %v2738
  %v2905 = vunpack.c.l.b16 %v2739
  %v2906 = vunpack.c.l.b16 %v2740
  %v2907 = vunpack.c.l.b16 %v2741
  %v2908 = vunpack.c.l.b16 %v2742
  %v2909 = vunpack.c.l.b16 %v2743
  %v2910 = vunpack.c.l.b16 %v2744
  %v2911 = vunpack.c.l.b16 %v2745
  %v2912 = vunpack.c.l.b16 %v2746
  %v2913 = vunpack.c.l.b16 %v2747
  %v2914 = vunpack.c.l.b16 %v2748
  %v2915 = vpack.c.b16 %v2900, %v2899
  %v2916 = vpack.c.b16 %v2902, %v2901
  %v2917 = vpack.c.b16 %v2904, %v2903
  %v2918 = vpack.c.b16 %v2906, %v2905
  %v2919 = vpack.c.b16 %v2908, %v2907
  %v2920 = vpack.c.b16 %v2910, %v2909
  %v2921 = vpack.c.b16 %v2912, %v2911
  %v2922 = vpack.c.b16 %v2914, %v2913
  %2931 = vmatpush.bf16.msra.mxu0 %v2922
  %2932 = vmatpush.bf16.msra.mxu0 %v2921
  %2933 = vmatpush.bf16.msra.mxu0 %v2920
  %2934 = vmatpush.bf16.msra.mxu0 %v2919
  %2935 = vmatpush.bf16.msra.mxu0 %v2918
  %2936 = vmatpush.bf16.msra.mxu0 %v2917
  %2937 = vmatpush.bf16.msra.mxu0 %v2916
  %2938 = vmatpush.bf16.msra.mxu0 %v2915
  %2939 = vmatmul.bf16.gmra.mxu0 %v2879
  %v2940 = vpop.f32.mrf.mxu0
  %v2941 = vadd.f32 %v2881, %v2940
  %v2942 = vpop.f32.mrf.mxu0
  %2943 = vdwg.mxu0
  %2944 = vst [vmem:[%s11] sm:$0xff] %v2941
  // Predicated region
  $region46: #{gcnnet_forward.1} parent=0 // pred_check
    _
  $region47: #{gcnnet_forward.1} parent=0 // pred_check_branch
    %2946 = sbr.rel (0) target = $region49
  $region48: #{gcnnet_forward.1} parent=0 // pred_region
    _
  $region49: #{gcnnet_forward.1} parent=0 // pred_fallthru
    _
  // Predicated region
  $region50: #{gcnnet_forward.1} parent=0 // pred_check
    _
  $region51: #{gcnnet_forward.1} parent=0 // pred_check_branch
    %2948 = sbr.rel (0) target = $region53
  $region52: #{gcnnet_forward.1} parent=0 // pred_region
    _
  $region53: #{gcnnet_forward.1} parent=0 // pred_fallthru
    _

</llo_original>
